<compile_context>
chip_gen: v6e
topology: v6e:2x2x1
jax: 0.10.0
libtpu: 0.0.40
codegen_flags: <defaults>
</compile_context>

<pallas_src>
import functools
import math

import numpy as np
import jax
import jax.numpy as jnp
from jax import lax
from jax.experimental import pallas as pl
from jax.experimental.pallas import tpu as pltpu


# ----------------------------------------------------------------------------
# In-kernel helpers (also reused by the pure-JAX reference)
# ----------------------------------------------------------------------------
def _layer_norm(x, gamma, beta, eps=1e-12):
    mu = jnp.mean(x, axis=-1, keepdims=True)
    var = jnp.mean((x - mu) ** 2, axis=-1, keepdims=True)
    return (x - mu) * lax.rsqrt(var + eps) * gamma + beta


def _gelu(x):
    # tanh approximation of GELU (EUP-friendly)
    c = math.sqrt(2.0 / math.pi)
    return 0.5 * x * (1.0 + jnp.tanh(c * (x + 0.044715 * x * x * x)))


# ----------------------------------------------------------------------------
# Fused kernel: encoder layer + entity subword mean pooling + fc
# (one grid step = B_blk samples)
# ----------------------------------------------------------------------------
def _fused_kernel(x_ref, bias_ref, pool_ref,
                  wqkv_ref, bqkv_ref, wo_ref, bo_ref,
                  w1_ref, b1_ref, w2_ref, b2_ref, ln_ref,
                  wfc_ref, bfc_ref, out_ref):
    bf16 = jnp.bfloat16
    Bb, S, H = x_ref.shape                       # batch block, seq, hidden
    E = pool_ref.shape[1]                        # (sublane-padded) entity count

    x = x_ref[...]                               # (Bb, S, H) bf16 stream
    xf = x.reshape(Bb * S, H)                    # per-token view -> M = Bb*S rows
    x32 = xf.astype(jnp.float32)                 # f32 copy for residual/LN path

    # ---- self-attention (single head), fused QKV, bf16 MXU / f32 accumulate --
    qkv = jnp.dot(xf, wqkv_ref[...],
                  preferred_element_type=jnp.float32) + bqkv_ref[0]     # (Bb*S, 3H)
    qkv = qkv.reshape(Bb, S, 3 * H)
    q, k, v = qkv[..., :H], qkv[..., H:2 * H], qkv[..., 2 * H:]

    # Batched scores, contracting the hidden axis (no materialized K^T).
    scores = jnp.einsum("bqd,bkd->bqk", q.astype(bf16), k.astype(bf16),
                        preferred_element_type=jnp.float32) * (1.0 / math.sqrt(H))
    scores = scores + bias_ref[...]              # (Bb, 1, S) additive mask bias
    scores = scores - jnp.max(scores, axis=-1, keepdims=True)
    p = jnp.exp(scores)
    p = p * pl.reciprocal(jnp.sum(p, axis=-1, keepdims=True), approx=True)

    ctx = jnp.einsum("bqk,bkd->bqd", p.astype(bf16), v.astype(bf16),
                     preferred_element_type=jnp.float32)                # (Bb, S, H)
    ctx = ctx.reshape(Bb * S, H)
    attn = jnp.dot(ctx.astype(bf16), wo_ref[...],
                   preferred_element_type=jnp.float32) + bo_ref[0]

    ln = ln_ref[...]                             # (2, 2, H) f32
    h = _layer_norm(x32 + attn, ln[0, 0], ln[0, 1])

    # ---- FFN -----------------------------------------------------------------
    ffn_h = _gelu(jnp.dot(h.astype(bf16), w1_ref[...],
                          preferred_element_type=jnp.float32) + b1_ref[0])
    ffn = jnp.dot(ffn_h.astype(bf16), w2_ref[...],
                  preferred_element_type=jnp.float32) + b2_ref[0]
    hidden = _layer_norm(h + ffn, ln[1, 0], ln[1, 1])                   # (Bb*S, H)

    # ---- entity subword mean pooling + zero padding + fc (no HBM round trip) --
    hidden_b = hidden.reshape(Bb, S, H).astype(bf16)
    embs = jnp.einsum("bes,bsh->beh", pool_ref[...].astype(bf16), hidden_b,
                      preferred_element_type=jnp.float32)               # (Bb, E, H)
    logits = jnp.dot(embs.reshape(Bb * E, H).astype(bf16), wfc_ref[...],
                     preferred_element_type=jnp.float32) + bfc_ref[0]   # (Bb*E, NTP)
    out_ref[...] = logits.reshape(out_ref.shape)


# ----------------------------------------------------------------------------
# Sizing helpers
# ----------------------------------------------------------------------------
def _vmem_capacity_bytes():
    try:
        info = pltpu.get_tpu_info()
        cap = getattr(info, "vmem_capacity_bytes", None)
        if cap:
            return int(cap)
    except Exception:
        pass
    return 128 * 1024 * 1024


def _vmem_limit_bytes(B_blk, S, H, F, E, NTP):
    f32, bf16 = 4, 2
    # Per-step streamed blocks (double-buffered by the pipeline): x (bf16),
    # attention bias, pooling matrix, output logits.
    streams = 2 * (bf16 * B_blk * S * H
                   + f32 * (B_blk * S + B_blk * E * S + B_blk * E * NTP))
    # Constant-index weight blocks, single-buffered (pl.Buffered(1)).
    weights = (bf16 * (3 * H * H + H * H + 2 * H * F + H * NTP)
               + f32 * (3 * H + 2 * H + F + NTP + 4 * H))
    # In-kernel f32 temporaries (qkv, scores, probs, residual/LN chain, FFN).
    temps = f32 * (B_blk * S * 3 * H + 2 * B_blk * S * S + 5 * B_blk * S * H
                   + B_blk * S * F + B_blk * E * H + B_blk * E * NTP)
    need = int(1.5 * (streams + weights + temps))         # slack for Mosaic temps
    # Leave headroom below physical VMEM: ~48 MiB usable on v7x (64 MiB/TC),
    # ~112 MiB on v5e/v6e (128 MiB).
    cap = _vmem_capacity_bytes() - 16 * 1024 * 1024
    return int(min(max(need, 32 * 1024 * 1024), cap))


def _choose_batch_block(B, S, target_rows=256, min_grid=2):
    """Pick B_blk so B_blk*S ~ MXU pass height, keeping >=2 grid steps (v7x)."""
    b_blk = max(1, min(B, target_rows // max(S, 1)))
    while b_blk > 1 and -(-B // b_blk) < min_grid:
        b_blk //= 2
    return max(1, b_blk)


# ----------------------------------------------------------------------------
# pallas_call builder (cached per shape -> no per-forward retrace/recompile)
# ----------------------------------------------------------------------------
@functools.lru_cache(maxsize=None)
def _build_fused_call(n_blocks, B_blk, S, H, F, E, NTP):
    # Constant-index weight blocks: single-buffered (their block index never
    # changes across the batch grid), halving the weight VMEM footprint.
    def wspec(shape):
        return pl.BlockSpec(shape, lambda *_: (0,) * len(shape),
                            pipeline_mode=pl.Buffered(1))

    in_specs = [
        pl.BlockSpec((B_blk, S, H), lambda b: (b, 0, 0)),    # x (bf16 embeddings)
        pl.BlockSpec((B_blk, 1, S), lambda b: (b, 0, 0)),    # additive attn bias
        pl.BlockSpec((B_blk, E, S), lambda b: (b, 0, 0)),    # pooling matrix P
        wspec((H, 3 * H)),                                   # fused Wq|Wk|Wv (bf16)
        wspec((1, 3 * H)),                                   # fused bq|bk|bv
        wspec((H, H)),                                       # Wo (bf16)
        wspec((1, H)),                                       # bo
        wspec((H, F)),                                       # W1 (bf16)
        wspec((1, F)),                                       # b1
        wspec((F, H)),                                       # W2 (bf16)
        wspec((1, H)),                                       # b2
        wspec((2, 2, H)),                                    # layernorm gamma/beta x2
        wspec((H, NTP)),                                     # fc weight (bf16, lane-padded)
        wspec((1, NTP)),                                     # fc bias (lane-padded)
    ]
    out_specs = pl.BlockSpec((B_blk, E, NTP), lambda b: (b, 0, 0))

    B = n_blocks * B_blk
    flops = B * (2 * S * H * 3 * H            # fused QKV
                 + 2 * S * S * H * 2          # scores + ctx
                 + 2 * S * H * H              # attention output projection
                 + 2 * S * H * F * 2          # FFN
                 + 2 * E * S * H              # pooling matmul
                 + 2 * E * H * NTP)           # fc
    transcendentals = B * (S * S + S * F + S)
    bytes_accessed = (B * S * H * 2 + B * S * 4 + B * E * S * 4 + B * E * NTP * 4
                      + (3 * H * H + H * H + 2 * H * F + H * NTP) * 2
                      + (3 * H + 6 * H + F + NTP) * 4)

    return pl.pallas_call(
        _fused_kernel,
        out_shape=jax.ShapeDtypeStruct((B, E, NTP), jnp.float32),
        grid_spec=pltpu.PrefetchScalarGridSpec(
            num_scalar_prefetch=0,
            grid=(n_blocks,),
            in_specs=in_specs,
            out_specs=out_specs,
        ),
        compiler_params=pltpu.CompilerParams(
            dimension_semantics=("parallel",),
            vmem_limit_bytes=_vmem_limit_bytes(B_blk, S, H, F, E, NTP),
        ),
        cost_estimate=pl.CostEstimate(
            flops=int(flops),
            transcendentals=int(transcendentals),
            bytes_accessed=int(bytes_accessed),
        ),
    )


# ----------------------------------------------------------------------------
# Host-side glue
# ----------------------------------------------------------------------------
def densify_entity_pooling(entity_subw_indices_batch, S, sublane=8):
    """Ragged [[subword indices]] lists -> dense pooling matrix P[b, e, s].

    P[b, e, s] = 1/len(subwords) for each subword position s of entity e
    (duplicated indices accumulate, matching torch.mean over the stacked list).
    Padded entity rows are all-zero -> embs row == zero_emb -> logits == fc bias.
    """
    B = len(entity_subw_indices_batch)
    E = max(len(ents) for ents in entity_subw_indices_batch)     # max_seq_len
    E_pad = ((E + sublane - 1) // sublane) * sublane             # sublane-pad
    P = np.zeros((B, E_pad, S), np.float32)
    for b, ents in enumerate(entity_subw_indices_batch):
        for e, subw in enumerate(ents):
            wgt = 1.0 / len(subw)
            for ind in subw:
                P[b, e, ind] += wgt
    return jnp.asarray(P), E


def embed_inputs(params, input_ids, attention_mask):
    B, S = input_ids.shape
    # Stream activations to the kernel in bf16 (halves the dominant DMA);
    # residual / layernorm math is done in f32 inside the kernel.
    x = (params["emb_table"][input_ids] + params["pos_table"][None, :S, :]
         ).astype(jnp.bfloat16)
    attn_bias = ((1.0 - attention_mask.astype(jnp.float32)) * -1e9).reshape(B, 1, S)
    return x, attn_bias


def siamese_bert_el_forward(params, input_ids, attention_mask,
                            entity_subw_indices, n_tags):
    """labels=None inference path of SiameseBertElModel.forward -> logits."""
    B, S = input_ids.shape
    H = params["emb_table"].shape[1]
    F = params["w1"].shape[1]
    NTP = params["wfc_t"].shape[1]

    x, attn_bias = embed_inputs(params, input_ids, attention_mask)
    pool, n_real_entities = densify_entity_pooling(entity_subw_indices, S)
    E = pool.shape[1]

    B_blk = _choose_batch_block(B, S)
    n_blocks = -(-B // B_blk)
    B_pad = n_blocks * B_blk
    if B_pad != B:
        pad = B_pad - B
        x = jnp.pad(x, ((0, pad), (0, 0), (0, 0)))
        attn_bias = jnp.pad(attn_bias, ((0, pad), (0, 0), (0, 0)))
        pool = jnp.pad(pool, ((0, pad), (0, 0), (0, 0)))

    call = _build_fused_call(n_blocks, B_blk, S, H, F, E, NTP)
    logits_pad = call(x, attn_bias, pool,
                      params["wqkv"], params["bqkv"], params["wo"], params["bo"],
                      params["w1"], params["b1"], params["w2"], params["b2"],
                      params["ln"], params["wfc_t"], params["bfc"])

    # Slice away batch, sublane (entity) and lane (n_tags) padding.
    return logits_pad[:B, :n_real_entities, :n_tags]


# ----------------------------------------------------------------------------
# Pure-JAX reference (identical bf16/f32 math) for correctness checking
# ----------------------------------------------------------------------------
def reference_forward(params, x, attn_bias, pool, n_real_entities, n_tags):
    bf16 = jnp.bfloat16
    H = x.shape[-1]
    x32 = x.astype(jnp.float32)
    qkv = jnp.einsum("bsh,hk->bsk", x, params["wqkv"],
                     preferred_element_type=jnp.float32) + params["bqkv"][0]
    q, k, v = qkv[..., :H], qkv[..., H:2 * H], qkv[..., 2 * H:]
    scores = jnp.einsum("bqh,bkh->bqk", q.astype(bf16), k.astype(bf16),
                        preferred_element_type=jnp.float32) * (1.0 / math.sqrt(H))
    scores = scores + attn_bias
    scores = scores - scores.max(-1, keepdims=True)
    p = jnp.exp(scores)
    p = p / p.sum(-1, keepdims=True)
    ctx = jnp.einsum("bqk,bkh->bqh", p.astype(bf16), v.astype(bf16),
                     preferred_element_type=jnp.float32)
    attn = jnp.einsum("bsh,hk->bsk", ctx.astype(bf16), params["wo"],
                      preferred_element_type=jnp.float32) + params["bo"][0]
    h = _layer_norm(x32 + attn, params["ln"][0, 0], params["ln"][0, 1])
    ffn_h = _gelu(jnp.einsum("bsh,hf->bsf", h.astype(bf16), params["w1"],
                             preferred_element_type=jnp.float32) + params["b1"][0])
    ffn = jnp.einsum("bsf,fh->bsh", ffn_h.astype(bf16), params["w2"],
                     preferred_element_type=jnp.float32) + params["b2"][0]
    hidden = _layer_norm(h + ffn, params["ln"][1, 0], params["ln"][1, 1])
    embs = jnp.einsum("bes,bsh->beh", pool.astype(bf16), hidden.astype(bf16),
                      preferred_element_type=jnp.float32)
    logits = jnp.einsum("beh,ht->bet", embs.astype(bf16), params["wfc_t"],
                        preferred_element_type=jnp.float32) + params["bfc"][0]
    return logits[:, :n_real_entities, :n_tags]


# ----------------------------------------------------------------------------
# Parameter initialization (deterministic, synthetic)
# ----------------------------------------------------------------------------
def init_params(key, vocab, S, H, F, n_tags, n_tags_pad):
    ks = jax.random.split(key, 12)
    scale = 0.02
    bf16 = jnp.bfloat16

    def normal(k, shape):
        return scale * jax.random.normal(k, shape, jnp.float32)

    ones_h = jnp.ones((H,), jnp.float32)
    zeros_h = jnp.zeros((H,), jnp.float32)

    # fc = nn.Linear(emb_size, n_tags); weight stored pre-transposed and
    # lane-padded to n_tags_pad (zeros in the padding -> padded logits ignored).
    wfc = normal(ks[10], (H, n_tags))
    bfc = normal(ks[11], (1, n_tags))
    wfc_pad = jnp.zeros((H, n_tags_pad), jnp.float32).at[:, :n_tags].set(wfc)
    bfc_pad = jnp.zeros((1, n_tags_pad), jnp.float32).at[:, :n_tags].set(bfc)

    return {
        "emb_table": normal(ks[0], (vocab, H)),
        "pos_table": normal(ks[1], (S, H)),
        "wqkv": normal(ks[2], (H, 3 * H)).astype(bf16),   # fused Wq|Wk|Wv
        "bqkv": normal(ks[3], (1, 3 * H)),
        "wo": normal(ks[4], (H, H)).astype(bf16),
        "bo": normal(ks[5], (1, H)),
        "w1": normal(ks[6], (H, F)).astype(bf16),
        "b1": normal(ks[7], (1, F)),
        "w2": normal(ks[8], (F, H)).astype(bf16),
        "b2": normal(ks[9], (1, H)),
        "ln": jnp.stack([jnp.stack([ones_h, zeros_h]),
                         jnp.stack([ones_h, zeros_h])]),  # (2, 2, H)
        "wfc_t": wfc_pad.astype(bf16),                    # (H, NTP) bf16
        "bfc": bfc_pad,                                   # (1, NTP) f32
    }


if __name__ == "__main__":
    B, S, H, n_tags, vocab = 4, 16, 128, 8, 128
    F = 4 * H
    NTP = max(128, ((n_tags + 127) // 128) * 128)   # lane-dense fc output width

    key = jax.random.PRNGKey(0)
    k_params, k_ids = jax.random.split(key)
    params = init_params(k_params, vocab, S, H, F, n_tags, NTP)

    input_ids = jax.random.randint(k_ids, (B, S), 0, vocab, dtype=jnp.int32)
    attention_mask = jnp.array(
        [[1] * 12 + [0] * 4,
         [1] * 16,
         [1] * 10 + [0] * 6,
         [1] * 14 + [0] * 2], dtype=jnp.int32)

    # Ragged per-sample lists of entities, each entity a list of subword indices.
    entity_subw_indices = [
        [[1, 2], [4], [6, 7, 8]],     # sample 0: 3 entities
        [[2, 3, 4], [10]],            # sample 1: 2 entities (padded with zero_emb)
        [[5], [7, 8], [9, 10, 11]],   # sample 2: 3 entities
        [[1]],                        # sample 3: 1 entity (padded with zero_emb)
    ]

    logits = siamese_bert_el_forward(params, input_ids, attention_mask,
                                     entity_subw_indices, n_tags)
    logits = jax.block_until_ready(logits)

    max_ents = max(len(e) for e in entity_subw_indices)
    assert logits.shape == (B, max_ents, n_tags)
    assert bool(jnp.all(jnp.isfinite(logits)))
    # Padded entity rows must equal the fc bias (zero_emb @ W^T + b == b).
    assert bool(jnp.allclose(logits[1, 2], params["bfc"][0, :n_tags], atol=1e-6))
    assert bool(jnp.allclose(logits[3, 1], params["bfc"][0, :n_tags], atol=1e-6))

    # Cross-check against a pure-JAX reference using identical bf16/f32 math.
    x_ref_in, bias_ref_in = embed_inputs(params, input_ids, attention_mask)
    pool, n_real = densify_entity_pooling(entity_subw_indices, S)
    ref = jax.block_until_ready(
        reference_forward(params, x_ref_in, bias_ref_in, pool, n_real, n_tags))
    assert bool(jnp.allclose(logits, ref, atol=5e-3, rtol=5e-2))

    print("KERNEL_OK")
</pallas_src>

<mosaic_0001>
module attributes {stable_mosaic.version = 11 : i64} {
  func.func @_fused_kernel(%arg0: i32, %arg1: memref<2x16x128xbf16, #tpu.memory_space<vmem>>, %arg2: memref<2x1x16xf32, #tpu.memory_space<vmem>>, %arg3: memref<2x8x16xf32, #tpu.memory_space<vmem>>, %arg4: memref<128x384xbf16, #tpu.memory_space<vmem>>, %arg5: memref<1x384xf32, #tpu.memory_space<vmem>>, %arg6: memref<128x128xbf16, #tpu.memory_space<vmem>>, %arg7: memref<1x128xf32, #tpu.memory_space<vmem>>, %arg8: memref<128x512xbf16, #tpu.memory_space<vmem>>, %arg9: memref<1x512xf32, #tpu.memory_space<vmem>>, %arg10: memref<512x128xbf16, #tpu.memory_space<vmem>>, %arg11: memref<1x128xf32, #tpu.memory_space<vmem>>, %arg12: memref<2x2x128xf32, #tpu.memory_space<vmem>>, %arg13: memref<128x128xbf16, #tpu.memory_space<vmem>>, %arg14: memref<1x128xf32, #tpu.memory_space<vmem>>, %arg15: memref<2x8x128xf32, #tpu.memory_space<vmem>>) attributes {dimension_semantics = [#tpu.dimension_semantics<parallel>], iteration_bounds = array<i64: 2>, scalar_prefetch = 0 : i64, scratch_operands = 0 : i64, tpu.core_type = #tpu.core_type<tc>, window_params = [{transform_indices = @transform_0, window_bounds = array<i64: 2, 16, 128>}, {transform_indices = @transform_1, window_bounds = array<i64: 2, 1, 16>}, {transform_indices = @transform_2, window_bounds = array<i64: 2, 8, 16>}, {pipeline_mode = #tpu.pipeline_mode<synchronous>, transform_indices = @transform_3, window_bounds = array<i64: 128, 384>}, {pipeline_mode = #tpu.pipeline_mode<synchronous>, transform_indices = @transform_4, window_bounds = array<i64: 1, 384>}, {pipeline_mode = #tpu.pipeline_mode<synchronous>, transform_indices = @transform_5, window_bounds = array<i64: 128, 128>}, {pipeline_mode = #tpu.pipeline_mode<synchronous>, transform_indices = @transform_6, window_bounds = array<i64: 1, 128>}, {pipeline_mode = #tpu.pipeline_mode<synchronous>, transform_indices = @transform_7, window_bounds = array<i64: 128, 512>}, {pipeline_mode = #tpu.pipeline_mode<synchronous>, transform_indices = @transform_8, window_bounds = array<i64: 1, 512>}, {pipeline_mode = #tpu.pipeline_mode<synchronous>, transform_indices = @transform_9, window_bounds = array<i64: 512, 128>}, {pipeline_mode = #tpu.pipeline_mode<synchronous>, transform_indices = @transform_10, window_bounds = array<i64: 1, 128>}, {pipeline_mode = #tpu.pipeline_mode<synchronous>, transform_indices = @transform_11, window_bounds = array<i64: 2, 2, 128>}, {pipeline_mode = #tpu.pipeline_mode<synchronous>, transform_indices = @transform_12, window_bounds = array<i64: 128, 128>}, {pipeline_mode = #tpu.pipeline_mode<synchronous>, transform_indices = @transform_13, window_bounds = array<i64: 1, 128>}, {transform_indices = @transform_14, window_bounds = array<i64: 2, 8, 128>}]} {
    %c0 = arith.constant 0 : index
    %c0_0 = arith.constant 0 : index
    %c0_1 = arith.constant 0 : index
    %0 = vector.load %arg1[%c0, %c0_0, %c0_1] : memref<2x16x128xbf16, #tpu.memory_space<vmem>>, vector<2x16x128xbf16>
    %1 = vector.shape_cast %0 : vector<2x16x128xbf16> to vector<32x128xbf16>
    %2 = arith.extf %1 : vector<32x128xbf16> to vector<32x128xf32>
    %c0_2 = arith.constant 0 : index
    %c0_3 = arith.constant 0 : index
    %3 = vector.load %arg4[%c0_2, %c0_3] : memref<128x384xbf16, #tpu.memory_space<vmem>>, vector<128x384xbf16>
    %cst = arith.constant dense<0.000000e+00> : vector<32x384xf32>
    %4 = tpu.matmul %1, %3, %cst {dimension_numbers = #tpu.dot_dimension_numbers<[1], [0], [0], [1], [0, 0, 1, 1], [], []>} : vector<32x128xbf16>, vector<128x384xbf16>, vector<32x384xf32> -> vector<32x384xf32>
    %c0_4 = arith.constant 0 : index
    %c0_5 = arith.constant 0 : index
    %5 = vector.load %arg5[%c0_4, %c0_5] : memref<1x384xf32, #tpu.memory_space<vmem>>, vector<1x384xf32>
    %6 = vector.shape_cast %5 : vector<1x384xf32> to vector<384xf32>
    %7 = vector.shape_cast %6 : vector<384xf32> to vector<1x384xf32>
    %8 = vector.broadcast %7 : vector<1x384xf32> to vector<32x384xf32>
    %9 = arith.addf %4, %8 : vector<32x384xf32>
    %10 = vector.shape_cast %9 : vector<32x384xf32> to vector<2x16x384xf32>
    %11 = vector.extract_strided_slice %10 {offsets = [0, 0, 0], sizes = [2, 16, 128], strides = [1, 1, 1]} : vector<2x16x384xf32> to vector<2x16x128xf32>
    %12 = vector.extract_strided_slice %10 {offsets = [0, 0, 128], sizes = [2, 16, 128], strides = [1, 1, 1]} : vector<2x16x384xf32> to vector<2x16x128xf32>
    %13 = vector.extract_strided_slice %10 {offsets = [0, 0, 256], sizes = [2, 16, 128], strides = [1, 1, 1]} : vector<2x16x384xf32> to vector<2x16x128xf32>
    %14 = arith.truncf %11 : vector<2x16x128xf32> to vector<2x16x128xbf16>
    %15 = arith.truncf %12 : vector<2x16x128xf32> to vector<2x16x128xbf16>
    "tpu.trace_start"() <{level = 10 : i32, message = "bqd,bkd->bqk"}> : () -> ()
    %cst_6 = arith.constant dense<0.000000e+00> : vector<2x16x16xf32>
    %16 = tpu.matmul %14, %15, %cst_6 {dimension_numbers = #tpu.dot_dimension_numbers<[2], [2], [1], [1], [0, 0, 0, 1, 1, 1], [0], [0]>} : vector<2x16x128xbf16>, vector<2x16x128xbf16>, vector<2x16x16xf32> -> vector<2x16x16xf32>
    "tpu.trace_stop"() : () -> ()
    %cst_7 = arith.constant 0.0883883461 : f32
    %17 = vector.broadcast %cst_7 : f32 to vector<2x16x16xf32>
    %18 = arith.mulf %16, %17 : vector<2x16x16xf32>
    %c0_8 = arith.constant 0 : index
    %c0_9 = arith.constant 0 : index
    %c0_10 = arith.constant 0 : index
    %19 = vector.load %arg2[%c0_8, %c0_9, %c0_10] : memref<2x1x16xf32, #tpu.memory_space<vmem>>, vector<2x1x16xf32>
    %20 = vector.broadcast %19 : vector<2x1x16xf32> to vector<2x16x16xf32>
    %21 = arith.addf %18, %20 : vector<2x16x16xf32>
    %cst_11 = arith.constant dense<0xFF800000> : vector<2x16xf32>
    %22 = vector.multi_reduction <maximumf>, %21, %cst_11 [2] : vector<2x16x16xf32> to vector<2x16xf32>
    %23 = vector.shape_cast %22 : vector<2x16xf32> to vector<2x16x1xf32>
    %24 = vector.broadcast %23 : vector<2x16x1xf32> to vector<2x16x16xf32>
    %25 = arith.subf %21, %24 : vector<2x16x16xf32>
    %26 = math.exp %25 : vector<2x16x16xf32>
    %cst_12 = arith.constant dense<0.000000e+00> : vector<2x16xf32>
    %27 = vector.multi_reduction <add>, %26, %cst_12 [2] : vector<2x16x16xf32> to vector<2x16xf32>
    %28 = vector.shape_cast %27 : vector<2x16xf32> to vector<2x16x1xf32>
    %29 = tpu.reciprocal %28 {approx = true} : vector<2x16x1xf32> -> vector<2x16x1xf32>
    %30 = vector.broadcast %29 : vector<2x16x1xf32> to vector<2x16x16xf32>
    %31 = arith.mulf %26, %30 : vector<2x16x16xf32>
    %32 = arith.truncf %31 : vector<2x16x16xf32> to vector<2x16x16xbf16>
    %33 = arith.truncf %13 : vector<2x16x128xf32> to vector<2x16x128xbf16>
    "tpu.trace_start"() <{level = 10 : i32, message = "bqk,bkd->bqd"}> : () -> ()
    %cst_13 = arith.constant dense<0.000000e+00> : vector<2x16x128xf32>
    %34 = tpu.matmul %32, %33, %cst_13 {dimension_numbers = #tpu.dot_dimension_numbers<[2], [1], [1], [2], [0, 0, 0, 1, 1, 2], [0], [0]>} : vector<2x16x16xbf16>, vector<2x16x128xbf16>, vector<2x16x128xf32> -> vector<2x16x128xf32>
    "tpu.trace_stop"() : () -> ()
    %35 = vector.shape_cast %34 : vector<2x16x128xf32> to vector<32x128xf32>
    %36 = arith.truncf %35 : vector<32x128xf32> to vector<32x128xbf16>
    %c0_14 = arith.constant 0 : index
    %c0_15 = arith.constant 0 : index
    %37 = vector.load %arg6[%c0_14, %c0_15] : memref<128x128xbf16, #tpu.memory_space<vmem>>, vector<128x128xbf16>
    %cst_16 = arith.constant dense<0.000000e+00> : vector<32x128xf32>
    %38 = tpu.matmul %36, %37, %cst_16 {dimension_numbers = #tpu.dot_dimension_numbers<[1], [0], [0], [1], [0, 0, 1, 1], [], []>} : vector<32x128xbf16>, vector<128x128xbf16>, vector<32x128xf32> -> vector<32x128xf32>
    %c0_17 = arith.constant 0 : index
    %c0_18 = arith.constant 0 : index
    %39 = vector.load %arg7[%c0_17, %c0_18] : memref<1x128xf32, #tpu.memory_space<vmem>>, vector<1x128xf32>
    %40 = vector.shape_cast %39 : vector<1x128xf32> to vector<128xf32>
    %41 = vector.shape_cast %40 : vector<128xf32> to vector<1x128xf32>
    %42 = vector.broadcast %41 : vector<1x128xf32> to vector<32x128xf32>
    %43 = arith.addf %38, %42 : vector<32x128xf32>
    %c0_19 = arith.constant 0 : index
    %c0_20 = arith.constant 0 : index
    %c0_21 = arith.constant 0 : index
    %44 = vector.load %arg12[%c0_19, %c0_20, %c0_21] : memref<2x2x128xf32, #tpu.memory_space<vmem>>, vector<2x2x128xf32>
    %45 = arith.addf %2, %43 : vector<32x128xf32>
    %46 = vector.extract_strided_slice %44 {offsets = [0, 0, 0], sizes = [1, 1, 128], strides = [1, 1, 1]} : vector<2x2x128xf32> to vector<1x1x128xf32>
    %47 = vector.shape_cast %46 : vector<1x1x128xf32> to vector<128xf32>
    %48 = vector.extract_strided_slice %44 {offsets = [0, 1, 0], sizes = [1, 1, 128], strides = [1, 1, 1]} : vector<2x2x128xf32> to vector<1x1x128xf32>
    %49 = vector.shape_cast %48 : vector<1x1x128xf32> to vector<128xf32>
    %cst_22 = arith.constant dense<0.000000e+00> : vector<32xf32>
    %50 = vector.multi_reduction <add>, %45, %cst_22 [1] : vector<32x128xf32> to vector<32xf32>
    %51 = vector.shape_cast %50 : vector<32xf32> to vector<32x1xf32>
    %cst_23 = arith.constant 1.280000e+02 : f32
    %52 = vector.broadcast %cst_23 : f32 to vector<32x1xf32>
    %53 = arith.divf %51, %52 : vector<32x1xf32>
    %54 = vector.broadcast %53 : vector<32x1xf32> to vector<32x128xf32>
    %55 = arith.subf %45, %54 : vector<32x128xf32>
    %56 = arith.mulf %55, %55 : vector<32x128xf32>
    %cst_24 = arith.constant dense<0.000000e+00> : vector<32xf32>
    %57 = vector.multi_reduction <add>, %56, %cst_24 [1] : vector<32x128xf32> to vector<32xf32>
    %58 = vector.shape_cast %57 : vector<32xf32> to vector<32x1xf32>
    %cst_25 = arith.constant 1.280000e+02 : f32
    %59 = vector.broadcast %cst_25 : f32 to vector<32x1xf32>
    %60 = arith.divf %58, %59 : vector<32x1xf32>
    %61 = vector.broadcast %53 : vector<32x1xf32> to vector<32x128xf32>
    %62 = arith.subf %45, %61 : vector<32x128xf32>
    %cst_26 = arith.constant 9.99999996E-13 : f32
    %63 = vector.broadcast %cst_26 : f32 to vector<32x1xf32>
    %64 = arith.addf %60, %63 : vector<32x1xf32>
    %65 = math.rsqrt %64 : vector<32x1xf32>
    %66 = vector.broadcast %65 : vector<32x1xf32> to vector<32x128xf32>
    %67 = arith.mulf %62, %66 : vector<32x128xf32>
    %68 = vector.shape_cast %47 : vector<128xf32> to vector<1x128xf32>
    %69 = vector.broadcast %68 : vector<1x128xf32> to vector<32x128xf32>
    %70 = arith.mulf %67, %69 : vector<32x128xf32>
    %71 = vector.shape_cast %49 : vector<128xf32> to vector<1x128xf32>
    %72 = vector.broadcast %71 : vector<1x128xf32> to vector<32x128xf32>
    %73 = arith.addf %70, %72 : vector<32x128xf32>
    %74 = arith.truncf %73 : vector<32x128xf32> to vector<32x128xbf16>
    %c0_27 = arith.constant 0 : index
    %c0_28 = arith.constant 0 : index
    %75 = vector.load %arg8[%c0_27, %c0_28] : memref<128x512xbf16, #tpu.memory_space<vmem>>, vector<128x512xbf16>
    %cst_29 = arith.constant dense<0.000000e+00> : vector<32x512xf32>
    %76 = tpu.matmul %74, %75, %cst_29 {dimension_numbers = #tpu.dot_dimension_numbers<[1], [0], [0], [1], [0, 0, 1, 1], [], []>} : vector<32x128xbf16>, vector<128x512xbf16>, vector<32x512xf32> -> vector<32x512xf32>
    %c0_30 = arith.constant 0 : index
    %c0_31 = arith.constant 0 : index
    %77 = vector.load %arg9[%c0_30, %c0_31] : memref<1x512xf32, #tpu.memory_space<vmem>>, vector<1x512xf32>
    %78 = vector.shape_cast %77 : vector<1x512xf32> to vector<512xf32>
    %79 = vector.shape_cast %78 : vector<512xf32> to vector<1x512xf32>
    %80 = vector.broadcast %79 : vector<1x512xf32> to vector<32x512xf32>
    %81 = arith.addf %76, %80 : vector<32x512xf32>
    %cst_32 = arith.constant 5.000000e-01 : f32
    %82 = vector.broadcast %cst_32 : f32 to vector<32x512xf32>
    %83 = arith.mulf %82, %81 : vector<32x512xf32>
    %cst_33 = arith.constant 4.471500e-02 : f32
    %84 = vector.broadcast %cst_33 : f32 to vector<32x512xf32>
    %85 = arith.mulf %84, %81 : vector<32x512xf32>
    %86 = arith.mulf %85, %81 : vector<32x512xf32>
    %87 = arith.mulf %86, %81 : vector<32x512xf32>
    %88 = arith.addf %81, %87 : vector<32x512xf32>
    %cst_34 = arith.constant 0.797884583 : f32
    %89 = vector.broadcast %cst_34 : f32 to vector<32x512xf32>
    %90 = arith.mulf %89, %88 : vector<32x512xf32>
    %91 = math.tanh %90 : vector<32x512xf32>
    %cst_35 = arith.constant 1.000000e+00 : f32
    %92 = vector.broadcast %cst_35 : f32 to vector<32x512xf32>
    %93 = arith.addf %92, %91 : vector<32x512xf32>
    %94 = arith.mulf %83, %93 : vector<32x512xf32>
    %95 = arith.truncf %94 : vector<32x512xf32> to vector<32x512xbf16>
    %c0_36 = arith.constant 0 : index
    %c0_37 = arith.constant 0 : index
    %96 = vector.load %arg10[%c0_36, %c0_37] : memref<512x128xbf16, #tpu.memory_space<vmem>>, vector<512x128xbf16>
    %cst_38 = arith.constant dense<0.000000e+00> : vector<32x128xf32>
    %97 = tpu.matmul %95, %96, %cst_38 {dimension_numbers = #tpu.dot_dimension_numbers<[1], [0], [0], [1], [0, 0, 1, 1], [], []>} : vector<32x512xbf16>, vector<512x128xbf16>, vector<32x128xf32> -> vector<32x128xf32>
    %c0_39 = arith.constant 0 : index
    %c0_40 = arith.constant 0 : index
    %98 = vector.load %arg11[%c0_39, %c0_40] : memref<1x128xf32, #tpu.memory_space<vmem>>, vector<1x128xf32>
    %99 = vector.shape_cast %98 : vector<1x128xf32> to vector<128xf32>
    %100 = vector.shape_cast %99 : vector<128xf32> to vector<1x128xf32>
    %101 = vector.broadcast %100 : vector<1x128xf32> to vector<32x128xf32>
    %102 = arith.addf %97, %101 : vector<32x128xf32>
    %103 = arith.addf %73, %102 : vector<32x128xf32>
    %104 = vector.extract_strided_slice %44 {offsets = [1, 0, 0], sizes = [1, 1, 128], strides = [1, 1, 1]} : vector<2x2x128xf32> to vector<1x1x128xf32>
    %105 = vector.shape_cast %104 : vector<1x1x128xf32> to vector<128xf32>
    %106 = vector.extract_strided_slice %44 {offsets = [1, 1, 0], sizes = [1, 1, 128], strides = [1, 1, 1]} : vector<2x2x128xf32> to vector<1x1x128xf32>
    %107 = vector.shape_cast %106 : vector<1x1x128xf32> to vector<128xf32>
    %cst_41 = arith.constant dense<0.000000e+00> : vector<32xf32>
    %108 = vector.multi_reduction <add>, %103, %cst_41 [1] : vector<32x128xf32> to vector<32xf32>
    %109 = vector.shape_cast %108 : vector<32xf32> to vector<32x1xf32>
    %cst_42 = arith.constant 1.280000e+02 : f32
    %110 = vector.broadcast %cst_42 : f32 to vector<32x1xf32>
    %111 = arith.divf %109, %110 : vector<32x1xf32>
    %112 = vector.broadcast %111 : vector<32x1xf32> to vector<32x128xf32>
    %113 = arith.subf %103, %112 : vector<32x128xf32>
    %114 = arith.mulf %113, %113 : vector<32x128xf32>
    %cst_43 = arith.constant dense<0.000000e+00> : vector<32xf32>
    %115 = vector.multi_reduction <add>, %114, %cst_43 [1] : vector<32x128xf32> to vector<32xf32>
    %116 = vector.shape_cast %115 : vector<32xf32> to vector<32x1xf32>
    %cst_44 = arith.constant 1.280000e+02 : f32
    %117 = vector.broadcast %cst_44 : f32 to vector<32x1xf32>
    %118 = arith.divf %116, %117 : vector<32x1xf32>
    %119 = vector.broadcast %111 : vector<32x1xf32> to vector<32x128xf32>
    %120 = arith.subf %103, %119 : vector<32x128xf32>
    %cst_45 = arith.constant 9.99999996E-13 : f32
    %121 = vector.broadcast %cst_45 : f32 to vector<32x1xf32>
    %122 = arith.addf %118, %121 : vector<32x1xf32>
    %123 = math.rsqrt %122 : vector<32x1xf32>
    %124 = vector.broadcast %123 : vector<32x1xf32> to vector<32x128xf32>
    %125 = arith.mulf %120, %124 : vector<32x128xf32>
    %126 = vector.shape_cast %105 : vector<128xf32> to vector<1x128xf32>
    %127 = vector.broadcast %126 : vector<1x128xf32> to vector<32x128xf32>
    %128 = arith.mulf %125, %127 : vector<32x128xf32>
    %129 = vector.shape_cast %107 : vector<128xf32> to vector<1x128xf32>
    %130 = vector.broadcast %129 : vector<1x128xf32> to vector<32x128xf32>
    %131 = arith.addf %128, %130 : vector<32x128xf32>
    %132 = vector.shape_cast %131 : vector<32x128xf32> to vector<2x16x128xf32>
    %133 = arith.truncf %132 : vector<2x16x128xf32> to vector<2x16x128xbf16>
    %c0_46 = arith.constant 0 : index
    %c0_47 = arith.constant 0 : index
    %c0_48 = arith.constant 0 : index
    %134 = vector.load %arg3[%c0_46, %c0_47, %c0_48] : memref<2x8x16xf32, #tpu.memory_space<vmem>>, vector<2x8x16xf32>
    %135 = arith.truncf %134 : vector<2x8x16xf32> to vector<2x8x16xbf16>
    "tpu.trace_start"() <{level = 10 : i32, message = "bes,bsh->beh"}> : () -> ()
    %cst_49 = arith.constant dense<0.000000e+00> : vector<2x8x128xf32>
    %136 = tpu.matmul %135, %133, %cst_49 {dimension_numbers = #tpu.dot_dimension_numbers<[2], [1], [1], [2], [0, 0, 0, 1, 1, 2], [0], [0]>} : vector<2x8x16xbf16>, vector<2x16x128xbf16>, vector<2x8x128xf32> -> vector<2x8x128xf32>
    "tpu.trace_stop"() : () -> ()
    %137 = vector.shape_cast %136 : vector<2x8x128xf32> to vector<16x128xf32>
    %138 = arith.truncf %137 : vector<16x128xf32> to vector<16x128xbf16>
    %c0_50 = arith.constant 0 : index
    %c0_51 = arith.constant 0 : index
    %139 = vector.load %arg13[%c0_50, %c0_51] : memref<128x128xbf16, #tpu.memory_space<vmem>>, vector<128x128xbf16>
    %cst_52 = arith.constant dense<0.000000e+00> : vector<16x128xf32>
    %140 = tpu.matmul %138, %139, %cst_52 {dimension_numbers = #tpu.dot_dimension_numbers<[1], [0], [0], [1], [0, 0, 1, 1], [], []>} : vector<16x128xbf16>, vector<128x128xbf16>, vector<16x128xf32> -> vector<16x128xf32>
    %c0_53 = arith.constant 0 : index
    %c0_54 = arith.constant 0 : index
    %141 = vector.load %arg14[%c0_53, %c0_54] : memref<1x128xf32, #tpu.memory_space<vmem>>, vector<1x128xf32>
    %142 = vector.shape_cast %141 : vector<1x128xf32> to vector<128xf32>
    %143 = vector.shape_cast %142 : vector<128xf32> to vector<1x128xf32>
    %144 = vector.broadcast %143 : vector<1x128xf32> to vector<16x128xf32>
    %145 = arith.addf %140, %144 : vector<16x128xf32>
    %146 = vector.shape_cast %145 : vector<16x128xf32> to vector<2x8x128xf32>
    %c0_55 = arith.constant 0 : index
    %c0_56 = arith.constant 0 : index
    %c0_57 = arith.constant 0 : index
    %147 = vector.load %arg15[%c0_55, %c0_56, %c0_57] : memref<2x8x128xf32, #tpu.memory_space<vmem>>, vector<2x8x128xf32>
    tpu.vector_store %arg15[%c0_55, %c0_56, %c0_57], %146 {strides = array<i32>} : memref<2x8x128xf32, #tpu.memory_space<vmem>>, vector<2x8x128xf32>,
    return
  }
  func.func @transform_0(%arg0: i32) -> (i32, i32, i32) {
    %c0_i32 = arith.constant 0 : i32
    %c0_i32_0 = arith.constant 0 : i32
    %c0_i32_1 = arith.constant 0 : i32
    return %arg0, %c0_i32, %c0_i32_0 : i32, i32, i32
  }
  func.func @transform_1(%arg0: i32) -> (i32, i32, i32) {
    %c0_i32 = arith.constant 0 : i32
    %c0_i32_0 = arith.constant 0 : i32
    %c0_i32_1 = arith.constant 0 : i32
    return %arg0, %c0_i32, %c0_i32_0 : i32, i32, i32
  }
  func.func @transform_2(%arg0: i32) -> (i32, i32, i32) {
    %c0_i32 = arith.constant 0 : i32
    %c0_i32_0 = arith.constant 0 : i32
    %c0_i32_1 = arith.constant 0 : i32
    return %arg0, %c0_i32, %c0_i32_0 : i32, i32, i32
  }
  func.func @transform_3(%arg0: i32) -> (i32, i32) {
    %c0_i32 = arith.constant 0 : i32
    %c0_i32_0 = arith.constant 0 : i32
    %c0_i32_1 = arith.constant 0 : i32
    return %c0_i32, %c0_i32_0 : i32, i32
  }
  func.func @transform_4(%arg0: i32) -> (i32, i32) {
    %c0_i32 = arith.constant 0 : i32
    %c0_i32_0 = arith.constant 0 : i32
    %c0_i32_1 = arith.constant 0 : i32
    return %c0_i32, %c0_i32_0 : i32, i32
  }
  func.func @transform_5(%arg0: i32) -> (i32, i32) {
    %c0_i32 = arith.constant 0 : i32
    %c0_i32_0 = arith.constant 0 : i32
    %c0_i32_1 = arith.constant 0 : i32
    return %c0_i32, %c0_i32_0 : i32, i32
  }
  func.func @transform_6(%arg0: i32) -> (i32, i32) {
    %c0_i32 = arith.constant 0 : i32
    %c0_i32_0 = arith.constant 0 : i32
    %c0_i32_1 = arith.constant 0 : i32
    return %c0_i32, %c0_i32_0 : i32, i32
  }
  func.func @transform_7(%arg0: i32) -> (i32, i32) {
    %c0_i32 = arith.constant 0 : i32
    %c0_i32_0 = arith.constant 0 : i32
    %c0_i32_1 = arith.constant 0 : i32
    return %c0_i32, %c0_i32_0 : i32, i32
  }
  func.func @transform_8(%arg0: i32) -> (i32, i32) {
    %c0_i32 = arith.constant 0 : i32
    %c0_i32_0 = arith.constant 0 : i32
    %c0_i32_1 = arith.constant 0 : i32
    return %c0_i32, %c0_i32_0 : i32, i32
  }
  func.func @transform_9(%arg0: i32) -> (i32, i32) {
    %c0_i32 = arith.constant 0 : i32
    %c0_i32_0 = arith.constant 0 : i32
    %c0_i32_1 = arith.constant 0 : i32
    return %c0_i32, %c0_i32_0 : i32, i32
  }
  func.func @transform_10(%arg0: i32) -> (i32, i32) {
    %c0_i32 = arith.constant 0 : i32
    %c0_i32_0 = arith.constant 0 : i32
    %c0_i32_1 = arith.constant 0 : i32
    return %c0_i32, %c0_i32_0 : i32, i32
  }
  func.func @transform_11(%arg0: i32) -> (i32, i32, i32) {
    %c0_i32 = arith.constant 0 : i32
    %c0_i32_0 = arith.constant 0 : i32
    %c0_i32_1 = arith.constant 0 : i32
    %c0_i32_2 = arith.constant 0 : i32
    return %c0_i32, %c0_i32_0, %c0_i32_1 : i32, i32, i32
  }
  func.func @transform_12(%arg0: i32) -> (i32, i32) {
    %c0_i32 = arith.constant 0 : i32
    %c0_i32_0 = arith.constant 0 : i32
    %c0_i32_1 = arith.constant 0 : i32
    return %c0_i32, %c0_i32_0 : i32, i32
  }
  func.func @transform_13(%arg0: i32) -> (i32, i32) {
    %c0_i32 = arith.constant 0 : i32
    %c0_i32_0 = arith.constant 0 : i32
    %c0_i32_1 = arith.constant 0 : i32
    return %c0_i32, %c0_i32_0 : i32, i32
  }
  func.func @transform_14(%arg0: i32) -> (i32, i32, i32) {
    %c0_i32 = arith.constant 0 : i32
    %c0_i32_0 = arith.constant 0 : i32
    %c0_i32_1 = arith.constant 0 : i32
    return %arg0, %c0_i32, %c0_i32_0 : i32, i32, i32
  }
}

</mosaic_0001>

<llo_original>
// kernel: tpu_custom_call.1
$region0: #{tpu_custom_call.1}
  #allocation0 [shape = 'u32[]', space=smem, size = 0x4, offset = 0x4, fixed_abs, tag = 'smem constant byte address 0x4 - core index']
  #allocation1 [shape = 'u32[144,128]{1,0:T(1,128)}', space=vmem, size = 0x12000, scoped, tag = 'internal scratch']
  %s0 = inlined_call_operand.hbm [shape: bf16[4,16,128], index: 0, kind: input, shape index: {}]
  %s1 = inlined_call_operand.hbm [shape: f32[4,1,16], index: 1, kind: input, shape index: {}]
  %s2 = inlined_call_operand.hbm [shape: f32[4,8,16], index: 2, kind: input, shape index: {}]
  %s3 = inlined_call_operand.hbm [shape: bf16[128,384], index: 3, kind: input, shape index: {}]
  %s4 = inlined_call_operand.hbm [shape: f32[1,384], index: 4, kind: input, shape index: {}]
  %s5 = inlined_call_operand.hbm [shape: bf16[128,128], index: 5, kind: input, shape index: {}]
  %s6 = inlined_call_operand.vmem [shape: f32[1,128], index: 6, kind: input, shape index: {}]
  %s7 = inlined_call_operand.hbm [shape: bf16[128,512], index: 7, kind: input, shape index: {}]
  %s8 = inlined_call_operand.vmem [shape: f32[1,512], index: 8, kind: input, shape index: {}]
  %s9 = inlined_call_operand.hbm [shape: bf16[512,128], index: 9, kind: input, shape index: {}]
  %s10 = inlined_call_operand.vmem [shape: f32[1,128], index: 10, kind: input, shape index: {}]
  %s11 = inlined_call_operand.vmem [shape: f32[2,2,128], index: 11, kind: input, shape index: {}]
  %s12 = inlined_call_operand.hbm [shape: bf16[128,128], index: 12, kind: input, shape index: {}]
  %s13 = inlined_call_operand.vmem [shape: f32[1,128], index: 13, kind: input, shape index: {}]
  %s14 = inlined_call_operand.hbm [shape: f32[4,8,128], index: 14, kind: output, shape index: {}]
  %s15 = sld [smem:[#allocation0]]
  $region125: #{tpu_custom_call.1} parent=0
    _
  %s17 = ssub.s32 1, %s15
  %s18 = scalar_select 0, %s17, %s15
  $region1: #{tpu_custom_call.1} parent=0
    #allocation2 [shape = 'u8[16384]{0}', space=vmem, size = 0x4000, scoped, tag = 'input window, operand 0']
    #allocation3 [shape = 's32[2]{0}', space=sflag, size = 0x8, scoped, tag = 'scoped memory for tpu_custom_call.1']
    #allocation4 [shape = 's32[2]{0}', space=sflag, size = 0x8, scoped, tag = 'scoped memory for tpu_custom_call.1']
    #allocation5 [shape = 'u8[2048]{0}', space=vmem, size = 0x800, scoped, tag = 'input window, operand 1']
    #allocation6 [shape = 's32[2]{0}', space=sflag, size = 0x8, scoped, tag = 'scoped memory for tpu_custom_call.1']
    #allocation7 [shape = 'u8[16384]{0}', space=vmem, size = 0x4000, scoped, tag = 'input window, operand 2']
    #allocation8 [shape = 'u8[98304]{0}', space=vmem, size = 0x18000, scoped, tag = 'input window, operand 3, single buffered']
    #allocation9 [shape = 's32[1]{0}', space=sflag, size = 0x4, scoped, tag = 'scoped memory for tpu_custom_call.1']
    #allocation10 [shape = 'u8[1536]{0}', space=vmem, size = 0x800, scoped, tag = 'input window, operand 4, single buffered']
    #allocation11 [shape = 'u8[32768]{0}', space=vmem, size = 0x8000, scoped, tag = 'input window, operand 5, single buffered']
    #allocation12 [shape = 's32[1]{0}', space=sflag, size = 0x4, scoped, tag = 'scoped memory for tpu_custom_call.1']
    #allocation13 [shape = 'u8[131072]{0}', space=vmem, size = 0x20000, scoped, tag = 'input window, operand 7, single buffered']
    #allocation14 [shape = 'u8[131072]{0}', space=vmem, size = 0x20000, scoped, tag = 'input window, operand 9, single buffered']
    #allocation15 [shape = 's32[1]{0}', space=sflag, size = 0x4, scoped, tag = 'scoped memory for tpu_custom_call.1']
    #allocation16 [shape = 'u8[32768]{0}', space=vmem, size = 0x8000, scoped, tag = 'input window, operand 12, single buffered']
    #allocation17 [shape = 'u8[16384]{0}', space=vmem, size = 0x4000, scoped, tag = 'output window, operand 0']
    %19 = vsyncpa [#allocation3], 0
    %s20 = scalar_lea.sflag [#allocation3], 1
    %21 = vsyncpa %s20, 0
    %22 = vsyncpa [#allocation6], 0
    %s23 = scalar_lea.sflag [#allocation6], 1
    %24 = vsyncpa %s23, 0
    %25 = vsyncpa [#allocation9], 0
    %26 = vsyncpa [#allocation12], 0
    %27 = vsyncpa [#allocation15], 0
    %28 = vsyncpa [#allocation4], 0
    %s29 = scalar_lea.sflag [#allocation4], 1
    %30 = vsyncpa %s29, 0
    loop: start=0, step=1, limit=4
    $region2: #{tpu_custom_call.1} parent=1 // loop_pre_header
      _
    $region3: #{tpu_custom_call.1} parent=1 // loop_header
      %s32 = sphi 0, %s36
      %p33 = scmp.ge.s32.totalorder %s32, 4
      %s42 = sphi 0, %s44
      %s45 = sphi 0, %s42
      %s46 = sphi 0, %s45
      %s62 = sphi 0, %s46
      %s68 = sphi 0, %s70
      %s71 = sphi 0, %s68
      %s72 = sphi 0, %s71
      %s88 = sphi 0, %s72
      %s94 = sphi 0, %s96
      %s97 = sphi 0, %s94
      %s98 = sphi 0, %s97
      %s114 = sphi 0, %s98
      %s118 = sphi 0, %s118
      %s120 = sphi 0, %s118
      %s121 = sphi 0, %s120
      %s135 = sphi 0, %s121
      %s139 = sphi 0, %s139
      %s141 = sphi 0, %s139
      %s142 = sphi 0, %s141
      %s156 = sphi 0, %s142
      %s160 = sphi 0, %s160
      %s162 = sphi 0, %s160
      %s163 = sphi 0, %s162
      %s177 = sphi 0, %s163
      %s181 = sphi 0, %s181
      %s183 = sphi 0, %s181
      %s184 = sphi 0, %s183
      %s198 = sphi 0, %s184
      %s202 = sphi 0, %s202
      %s204 = sphi 0, %s202
      %s205 = sphi 0, %s204
      %s219 = sphi 0, %s205
      %s223 = sphi 0, %s223
      %s225 = sphi 0, %s223
      %s226 = sphi 0, %s225
      %s240 = sphi 0, %s226
      %s244 = sphi 0, %s244
      %s246 = sphi 0, %s244
      %s247 = sphi 0, %s246
      %s261 = sphi 0, %s247
      %s265 = sphi 0, %s265
      %s267 = sphi 0, %s265
      %s268 = sphi 0, %s267
      %s282 = sphi 0, %s268
      %s286 = sphi 0, %s286
      %s288 = sphi 0, %s286
      %s289 = sphi 0, %s288
      %s303 = sphi 0, %s289
      %s307 = sphi 0, %s307
      %s309 = sphi 0, %s307
      %s310 = sphi 0, %s309
      %s324 = sphi 0, %s310
      %s328 = sphi 0, %s328
      %s330 = sphi 0, %s328
      %s331 = sphi 0, %s330
      %s345 = sphi 0, %s331
      %s351 = sphi 0, %s353
      %s354 = sphi 0, %s351
      %s355 = sphi 0, %s354
      %s371 = sphi 0, %s355
    $region4: #{tpu_custom_call.1} parent=1 // loop_header_branch
      %35 = sbr.rel (%p33) target = $region8
    $region5: #{tpu_custom_call.1} parent=1 // loop_body
      %s37 = ssub.s32 %s32, 1
      %s38 = ssub.s32 %s32, 2
      %s39 = sadd.s32 %s32, 1
      %s40 = ssub.s32 %s32, %s39
      %p41 = scmp.eq.s32.totalorder %s40, 0
      %s43 = sadd.s32 %s42, 1
      %s44 = scalar_select %p41, %s42, %s43
      %p47 = pneg %p41
      %p48 = scmp.eq.s32.totalorder %s32, 1
      %p49 = por %p47, %p48
      %p50 = scmp.ne.s32.totalorder %s42, %s45
      %p51 = scmp.eq.s32.totalorder %s32, 0
      %p52 = por %p50, %p51
      %p53 = scmp.ne.s32.totalorder %s42, %s45
      %p54 = scmp.eq.s32.totalorder %s37, 1
      %p55 = por %p53, %p54
      %p56 = scmp.ne.s32.totalorder %s45, %s46
      %p57 = scmp.eq.s32.totalorder %s37, 0
      %p58 = por %p56, %p57
      %p59 = scmp.ne.s32.totalorder %s45, %s46
      %p60 = scmp.eq.s32.totalorder %s38, 1
      %p61 = por %p59, %p60
      %p63 = scmp.ne.s32.totalorder %s46, %s62
      %p64 = scmp.eq.s32.totalorder %s38, 0
      %p65 = por %p63, %p64
      %s66 = ssub.s32 %s32, %s39
      %p67 = scmp.eq.s32.totalorder %s66, 0
      %s69 = sadd.s32 %s68, 1
      %s70 = scalar_select %p67, %s68, %s69
      %p73 = pneg %p67
      %p74 = scmp.eq.s32.totalorder %s32, 1
      %p75 = por %p73, %p74
      %p76 = scmp.ne.s32.totalorder %s68, %s71
      %p77 = scmp.eq.s32.totalorder %s32, 0
      %p78 = por %p76, %p77
      %p79 = scmp.ne.s32.totalorder %s68, %s71
      %p80 = scmp.eq.s32.totalorder %s37, 1
      %p81 = por %p79, %p80
      %p82 = scmp.ne.s32.totalorder %s71, %s72
      %p83 = scmp.eq.s32.totalorder %s37, 0
      %p84 = por %p82, %p83
      %p85 = scmp.ne.s32.totalorder %s71, %s72
      %p86 = scmp.eq.s32.totalorder %s38, 1
      %p87 = por %p85, %p86
      %p89 = scmp.ne.s32.totalorder %s72, %s88
      %p90 = scmp.eq.s32.totalorder %s38, 0
      %p91 = por %p89, %p90
      %s92 = ssub.s32 %s32, %s39
      %p93 = scmp.eq.s32.totalorder %s92, 0
      %s95 = sadd.s32 %s94, 1
      %s96 = scalar_select %p93, %s94, %s95
      %p99 = pneg %p93
      %p100 = scmp.eq.s32.totalorder %s32, 1
      %p101 = por %p99, %p100
      %p102 = scmp.ne.s32.totalorder %s94, %s97
      %p103 = scmp.eq.s32.totalorder %s32, 0
      %p104 = por %p102, %p103
      %p105 = scmp.ne.s32.totalorder %s94, %s97
      %p106 = scmp.eq.s32.totalorder %s37, 1
      %p107 = por %p105, %p106
      %p108 = scmp.ne.s32.totalorder %s97, %s98
      %p109 = scmp.eq.s32.totalorder %s37, 0
      %p110 = por %p108, %p109
      %p111 = scmp.ne.s32.totalorder %s97, %s98
      %p112 = scmp.eq.s32.totalorder %s38, 1
      %p113 = por %p111, %p112
      %p115 = scmp.ne.s32.totalorder %s98, %s114
      %p116 = scmp.eq.s32.totalorder %s38, 0
      %p117 = por %p115, %p116
      %s119 = sadd.s32 %s118, 1
      %p122 = scmp.eq.s32.totalorder %s32, 1
      %p123 = scmp.ne.s32.totalorder %s118, %s120
      %p124 = scmp.eq.s32.totalorder %s32, 0
      %p125 = por %p123, %p124
      %p126 = scmp.ne.s32.totalorder %s118, %s120
      %p127 = scmp.eq.s32.totalorder %s37, 1
      %p128 = por %p126, %p127
      %p129 = scmp.ne.s32.totalorder %s120, %s121
      %p130 = scmp.eq.s32.totalorder %s37, 0
      %p131 = por %p129, %p130
      %p132 = scmp.ne.s32.totalorder %s120, %s121
      %p133 = scmp.eq.s32.totalorder %s38, 1
      %p134 = por %p132, %p133
      %p136 = scmp.ne.s32.totalorder %s121, %s135
      %p137 = scmp.eq.s32.totalorder %s38, 0
      %p138 = por %p136, %p137
      %s140 = sadd.s32 %s139, 1
      %p143 = scmp.eq.s32.totalorder %s32, 1
      %p144 = scmp.ne.s32.totalorder %s139, %s141
      %p145 = scmp.eq.s32.totalorder %s32, 0
      %p146 = por %p144, %p145
      %p147 = scmp.ne.s32.totalorder %s139, %s141
      %p148 = scmp.eq.s32.totalorder %s37, 1
      %p149 = por %p147, %p148
      %p150 = scmp.ne.s32.totalorder %s141, %s142
      %p151 = scmp.eq.s32.totalorder %s37, 0
      %p152 = por %p150, %p151
      %p153 = scmp.ne.s32.totalorder %s141, %s142
      %p154 = scmp.eq.s32.totalorder %s38, 1
      %p155 = por %p153, %p154
      %p157 = scmp.ne.s32.totalorder %s142, %s156
      %p158 = scmp.eq.s32.totalorder %s38, 0
      %p159 = por %p157, %p158
      %s161 = sadd.s32 %s160, 1
      %p164 = scmp.eq.s32.totalorder %s32, 1
      %p165 = scmp.ne.s32.totalorder %s160, %s162
      %p166 = scmp.eq.s32.totalorder %s32, 0
      %p167 = por %p165, %p166
      %p168 = scmp.ne.s32.totalorder %s160, %s162
      %p169 = scmp.eq.s32.totalorder %s37, 1
      %p170 = por %p168, %p169
      %p171 = scmp.ne.s32.totalorder %s162, %s163
      %p172 = scmp.eq.s32.totalorder %s37, 0
      %p173 = por %p171, %p172
      %p174 = scmp.ne.s32.totalorder %s162, %s163
      %p175 = scmp.eq.s32.totalorder %s38, 1
      %p176 = por %p174, %p175
      %p178 = scmp.ne.s32.totalorder %s163, %s177
      %p179 = scmp.eq.s32.totalorder %s38, 0
      %p180 = por %p178, %p179
      %s182 = sadd.s32 %s181, 1
      %p185 = scmp.eq.s32.totalorder %s32, 1
      %p186 = scmp.ne.s32.totalorder %s181, %s183
      %p187 = scmp.eq.s32.totalorder %s32, 0
      %p188 = por %p186, %p187
      %p189 = scmp.ne.s32.totalorder %s181, %s183
      %p190 = scmp.eq.s32.totalorder %s37, 1
      %p191 = por %p189, %p190
      %p192 = scmp.ne.s32.totalorder %s183, %s184
      %p193 = scmp.eq.s32.totalorder %s37, 0
      %p194 = por %p192, %p193
      %p195 = scmp.ne.s32.totalorder %s183, %s184
      %p196 = scmp.eq.s32.totalorder %s38, 1
      %p197 = por %p195, %p196
      %p199 = scmp.ne.s32.totalorder %s184, %s198
      %p200 = scmp.eq.s32.totalorder %s38, 0
      %p201 = por %p199, %p200
      %s203 = sadd.s32 %s202, 1
      %p206 = scmp.eq.s32.totalorder %s32, 1
      %p207 = scmp.ne.s32.totalorder %s202, %s204
      %p208 = scmp.eq.s32.totalorder %s32, 0
      %p209 = por %p207, %p208
      %p210 = scmp.ne.s32.totalorder %s202, %s204
      %p211 = scmp.eq.s32.totalorder %s37, 1
      %p212 = por %p210, %p211
      %p213 = scmp.ne.s32.totalorder %s204, %s205
      %p214 = scmp.eq.s32.totalorder %s37, 0
      %p215 = por %p213, %p214
      %p216 = scmp.ne.s32.totalorder %s204, %s205
      %p217 = scmp.eq.s32.totalorder %s38, 1
      %p218 = por %p216, %p217
      %p220 = scmp.ne.s32.totalorder %s205, %s219
      %p221 = scmp.eq.s32.totalorder %s38, 0
      %p222 = por %p220, %p221
      %s224 = sadd.s32 %s223, 1
      %p227 = scmp.eq.s32.totalorder %s32, 1
      %p228 = scmp.ne.s32.totalorder %s223, %s225
      %p229 = scmp.eq.s32.totalorder %s32, 0
      %p230 = por %p228, %p229
      %p231 = scmp.ne.s32.totalorder %s223, %s225
      %p232 = scmp.eq.s32.totalorder %s37, 1
      %p233 = por %p231, %p232
      %p234 = scmp.ne.s32.totalorder %s225, %s226
      %p235 = scmp.eq.s32.totalorder %s37, 0
      %p236 = por %p234, %p235
      %p237 = scmp.ne.s32.totalorder %s225, %s226
      %p238 = scmp.eq.s32.totalorder %s38, 1
      %p239 = por %p237, %p238
      %p241 = scmp.ne.s32.totalorder %s226, %s240
      %p242 = scmp.eq.s32.totalorder %s38, 0
      %p243 = por %p241, %p242
      %s245 = sadd.s32 %s244, 1
      %p248 = scmp.eq.s32.totalorder %s32, 1
      %p249 = scmp.ne.s32.totalorder %s244, %s246
      %p250 = scmp.eq.s32.totalorder %s32, 0
      %p251 = por %p249, %p250
      %p252 = scmp.ne.s32.totalorder %s244, %s246
      %p253 = scmp.eq.s32.totalorder %s37, 1
      %p254 = por %p252, %p253
      %p255 = scmp.ne.s32.totalorder %s246, %s247
      %p256 = scmp.eq.s32.totalorder %s37, 0
      %p257 = por %p255, %p256
      %p258 = scmp.ne.s32.totalorder %s246, %s247
      %p259 = scmp.eq.s32.totalorder %s38, 1
      %p260 = por %p258, %p259
      %p262 = scmp.ne.s32.totalorder %s247, %s261
      %p263 = scmp.eq.s32.totalorder %s38, 0
      %p264 = por %p262, %p263
      %s266 = sadd.s32 %s265, 1
      %p269 = scmp.eq.s32.totalorder %s32, 1
      %p270 = scmp.ne.s32.totalorder %s265, %s267
      %p271 = scmp.eq.s32.totalorder %s32, 0
      %p272 = por %p270, %p271
      %p273 = scmp.ne.s32.totalorder %s265, %s267
      %p274 = scmp.eq.s32.totalorder %s37, 1
      %p275 = por %p273, %p274
      %p276 = scmp.ne.s32.totalorder %s267, %s268
      %p277 = scmp.eq.s32.totalorder %s37, 0
      %p278 = por %p276, %p277
      %p279 = scmp.ne.s32.totalorder %s267, %s268
      %p280 = scmp.eq.s32.totalorder %s38, 1
      %p281 = por %p279, %p280
      %p283 = scmp.ne.s32.totalorder %s268, %s282
      %p284 = scmp.eq.s32.totalorder %s38, 0
      %p285 = por %p283, %p284
      %s287 = sadd.s32 %s286, 1
      %p290 = scmp.eq.s32.totalorder %s32, 1
      %p291 = scmp.ne.s32.totalorder %s286, %s288
      %p292 = scmp.eq.s32.totalorder %s32, 0
      %p293 = por %p291, %p292
      %p294 = scmp.ne.s32.totalorder %s286, %s288
      %p295 = scmp.eq.s32.totalorder %s37, 1
      %p296 = por %p294, %p295
      %p297 = scmp.ne.s32.totalorder %s288, %s289
      %p298 = scmp.eq.s32.totalorder %s37, 0
      %p299 = por %p297, %p298
      %p300 = scmp.ne.s32.totalorder %s288, %s289
      %p301 = scmp.eq.s32.totalorder %s38, 1
      %p302 = por %p300, %p301
      %p304 = scmp.ne.s32.totalorder %s289, %s303
      %p305 = scmp.eq.s32.totalorder %s38, 0
      %p306 = por %p304, %p305
      %s308 = sadd.s32 %s307, 1
      %p311 = scmp.eq.s32.totalorder %s32, 1
      %p312 = scmp.ne.s32.totalorder %s307, %s309
      %p313 = scmp.eq.s32.totalorder %s32, 0
      %p314 = por %p312, %p313
      %p315 = scmp.ne.s32.totalorder %s307, %s309
      %p316 = scmp.eq.s32.totalorder %s37, 1
      %p317 = por %p315, %p316
      %p318 = scmp.ne.s32.totalorder %s309, %s310
      %p319 = scmp.eq.s32.totalorder %s37, 0
      %p320 = por %p318, %p319
      %p321 = scmp.ne.s32.totalorder %s309, %s310
      %p322 = scmp.eq.s32.totalorder %s38, 1
      %p323 = por %p321, %p322
      %p325 = scmp.ne.s32.totalorder %s310, %s324
      %p326 = scmp.eq.s32.totalorder %s38, 0
      %p327 = por %p325, %p326
      %s329 = sadd.s32 %s328, 1
      %p332 = scmp.eq.s32.totalorder %s32, 1
      %p333 = scmp.ne.s32.totalorder %s328, %s330
      %p334 = scmp.eq.s32.totalorder %s32, 0
      %p335 = por %p333, %p334
      %p336 = scmp.ne.s32.totalorder %s328, %s330
      %p337 = scmp.eq.s32.totalorder %s37, 1
      %p338 = por %p336, %p337
      %p339 = scmp.ne.s32.totalorder %s330, %s331
      %p340 = scmp.eq.s32.totalorder %s37, 0
      %p341 = por %p339, %p340
      %p342 = scmp.ne.s32.totalorder %s330, %s331
      %p343 = scmp.eq.s32.totalorder %s38, 1
      %p344 = por %p342, %p343
      %p346 = scmp.ne.s32.totalorder %s331, %s345
      %p347 = scmp.eq.s32.totalorder %s38, 0
      %p348 = por %p346, %p347
      %s349 = ssub.s32 %s32, %s39
      %p350 = scmp.eq.s32.totalorder %s349, 0
      %s352 = sadd.s32 %s351, 1
      %s353 = scalar_select %p350, %s351, %s352
      %p356 = pneg %p350
      %p357 = scmp.eq.s32.totalorder %s32, 1
      %p358 = por %p356, %p357
      %p359 = scmp.ne.s32.totalorder %s351, %s354
      %p360 = scmp.eq.s32.totalorder %s32, 0
      %p361 = por %p359, %p360
      %p362 = scmp.ne.s32.totalorder %s351, %s354
      %p363 = scmp.eq.s32.totalorder %s37, 1
      %p364 = por %p362, %p363
      %p365 = scmp.ne.s32.totalorder %s354, %s355
      %p366 = scmp.eq.s32.totalorder %s37, 0
      %p367 = por %p365, %p366
      %p368 = scmp.ne.s32.totalorder %s354, %s355
      %p369 = scmp.eq.s32.totalorder %s38, 1
      %p370 = por %p368, %p369
      %p372 = scmp.ne.s32.totalorder %s355, %s371
      %p373 = scmp.eq.s32.totalorder %s38, 0
      %p374 = por %p372, %p373
      %p375 = scmp.le.s32.totalorder 1, %s32
      %p376 = scmp.lt.s32.totalorder %s32, 3
      %p377 = pnand %p375, %p376
      %p378 = pneg %p377
      // Predicated region
      $region9: #{tpu_custom_call.1} parent=5 // pred_check
        _
      $region10: #{tpu_custom_call.1} parent=5 // pred_check_branch
        %380 = sbr.rel (%p377) target = $region12
      $region11: #{tpu_custom_call.1} parent=5 // pred_region
        %s381 = ssub.s32 %s32, 1
        // Predicated region
        $region13: #{tpu_custom_call.1} parent=11 // pred_check
          %p382 = pneg %p131
        $region14: #{tpu_custom_call.1} parent=11 // pred_check_branch
          %384 = sbr.rel (%p382) target = $region16
        $region15: #{tpu_custom_call.1} parent=11 // pred_region
          %s386 = ssub.s32 3072, 3072
          %387 = vsyncadd [#allocation9], %s386
          %s388 = sshll.u32 [#allocation8], 4
          %s389 = int_to_ptr.vmem [resolvable:$true] %s388
          %394 = dma.hbm_to_vmem [thread:$0]  %s3, 3072, %s389, [#allocation9], 192, 192, 12
        $region16: #{tpu_custom_call.1} parent=11 // pred_fallthru
          _
        // Predicated region
        $region17: #{tpu_custom_call.1} parent=11 // pred_check
          %p395 = pneg %p152
        $region18: #{tpu_custom_call.1} parent=11 // pred_check_branch
          %397 = sbr.rel (%p395) target = $region20
        $region19: #{tpu_custom_call.1} parent=11 // pred_region
          %s399 = ssub.s32 48, 48
          %400 = vsyncadd [#allocation9], %s399
          %s402 = sshll.u32 [#allocation10], 4
          %s403 = int_to_ptr.vmem [resolvable:$true] %s402
          %405 = dma.hbm_to_vmem [thread:$0]  %s4, 48, %s403, [#allocation9]
        $region20: #{tpu_custom_call.1} parent=11 // pred_fallthru
          _
        // Predicated region
        $region21: #{tpu_custom_call.1} parent=11 // pred_check
          %p406 = pneg %p173
        $region22: #{tpu_custom_call.1} parent=11 // pred_check_branch
          %408 = sbr.rel (%p406) target = $region24
        $region23: #{tpu_custom_call.1} parent=11 // pred_region
          %s410 = ssub.s32 1024, 1024
          %411 = vsyncadd [#allocation12], %s410
          %s412 = sshll.u32 [#allocation11], 4
          %s413 = int_to_ptr.vmem [resolvable:$true] %s412
          %418 = dma.hbm_to_vmem [thread:$0]  %s5, 1024, %s413, [#allocation12], 64, 64, 4
        $region24: #{tpu_custom_call.1} parent=11 // pred_fallthru
          _
        // Predicated region
        $region25: #{tpu_custom_call.1} parent=11 // pred_check
          %p419 = pneg %p194
        $region26: #{tpu_custom_call.1} parent=11 // pred_check_branch
          %421 = sbr.rel (%p419) target = $region28
        $region27: #{tpu_custom_call.1} parent=11 // pred_region
          _
        $region28: #{tpu_custom_call.1} parent=11 // pred_fallthru
          _
        // Predicated region
        $region29: #{tpu_custom_call.1} parent=11 // pred_check
          %p422 = pneg %p215
        $region30: #{tpu_custom_call.1} parent=11 // pred_check_branch
          %424 = sbr.rel (%p422) target = $region32
        $region31: #{tpu_custom_call.1} parent=11 // pred_region
          %s426 = ssub.s32 4096, 4096
          %427 = vsyncadd [#allocation12], %s426
          %s428 = sshll.u32 [#allocation13], 4
          %s429 = int_to_ptr.vmem [resolvable:$true] %s428
          %434 = dma.hbm_to_vmem [thread:$0]  %s7, 4096, %s429, [#allocation12], 256, 256, 16
        $region32: #{tpu_custom_call.1} parent=11 // pred_fallthru
          _
        // Predicated region
        $region33: #{tpu_custom_call.1} parent=11 // pred_check
          %p435 = pneg %p236
        $region34: #{tpu_custom_call.1} parent=11 // pred_check_branch
          %437 = sbr.rel (%p435) target = $region36
        $region35: #{tpu_custom_call.1} parent=11 // pred_region
          _
        $region36: #{tpu_custom_call.1} parent=11 // pred_fallthru
          _
        // Predicated region
        $region37: #{tpu_custom_call.1} parent=11 // pred_check
          %p438 = pneg %p257
        $region38: #{tpu_custom_call.1} parent=11 // pred_check_branch
          %440 = sbr.rel (%p438) target = $region40
        $region39: #{tpu_custom_call.1} parent=11 // pred_region
          %s442 = ssub.s32 4096, 4096
          %443 = vsyncadd [#allocation15], %s442
          %s444 = sshll.u32 [#allocation14], 4
          %s445 = int_to_ptr.vmem [resolvable:$true] %s444
          %450 = dma.hbm_to_vmem [thread:$0]  %s9, 4096, %s445, [#allocation15], 64, 64, 4
        $region40: #{tpu_custom_call.1} parent=11 // pred_fallthru
          _
        // Predicated region
        $region41: #{tpu_custom_call.1} parent=11 // pred_check
          %p451 = pneg %p278
        $region42: #{tpu_custom_call.1} parent=11 // pred_check_branch
          %453 = sbr.rel (%p451) target = $region44
        $region43: #{tpu_custom_call.1} parent=11 // pred_region
          _
        $region44: #{tpu_custom_call.1} parent=11 // pred_fallthru
          _
        // Predicated region
        $region45: #{tpu_custom_call.1} parent=11 // pred_check
          %p454 = pneg %p299
        $region46: #{tpu_custom_call.1} parent=11 // pred_check_branch
          %456 = sbr.rel (%p454) target = $region48
        $region47: #{tpu_custom_call.1} parent=11 // pred_region
          _
        $region48: #{tpu_custom_call.1} parent=11 // pred_fallthru
          _
        // Predicated region
        $region49: #{tpu_custom_call.1} parent=11 // pred_check
          %p457 = pneg %p320
        $region50: #{tpu_custom_call.1} parent=11 // pred_check_branch
          %459 = sbr.rel (%p457) target = $region52
        $region51: #{tpu_custom_call.1} parent=11 // pred_region
          %s461 = ssub.s32 1024, 1024
          %462 = vsyncadd [#allocation15], %s461
          %s463 = sshll.u32 [#allocation16], 4
          %s464 = int_to_ptr.vmem [resolvable:$true] %s463
          %469 = dma.hbm_to_vmem [thread:$0]  %s12, 1024, %s464, [#allocation15], 64, 64, 4
        $region52: #{tpu_custom_call.1} parent=11 // pred_fallthru
          _
        // Predicated region
        $region53: #{tpu_custom_call.1} parent=11 // pred_check
          %p470 = pneg %p341
        $region54: #{tpu_custom_call.1} parent=11 // pred_check_branch
          %472 = sbr.rel (%p470) target = $region56
        $region55: #{tpu_custom_call.1} parent=11 // pred_region
          _
        $region56: #{tpu_custom_call.1} parent=11 // pred_fallthru
          _
      $region12: #{tpu_custom_call.1} parent=5 // pred_fallthru
        _
      %p473 = scmp.lt.s32.totalorder %s32, 2
      // Predicated region
      $region57: #{tpu_custom_call.1} parent=5 // pred_check
        %p474 = pneg %p473
      $region58: #{tpu_custom_call.1} parent=5 // pred_check_branch
        %476 = sbr.rel (%p474) target = $region60
      $region59: #{tpu_custom_call.1} parent=5 // pred_region
        // Predicated region
        $region61: #{tpu_custom_call.1} parent=59 // pred_check
          %p477 = pneg %p52
        $region62: #{tpu_custom_call.1} parent=59 // pred_check_branch
          %479 = sbr.rel (%p477) target = $region64
        $region63: #{tpu_custom_call.1} parent=59 // pred_region
          %s480 = sand.u32 %s42, 1
          %s481 = scalar_lea.sflag [#allocation3], %s480
          %s482 = sand.u32 %s42, 1
          %s483 = smul.addr %s482, 16
          %s484 = scalar_lea.vmem [#allocation2], %s483
          %s485 = smul.u32 2, %s32
          %s487 = ssub.s32 256, 256
          %488 = vsyncadd %s481, %s487
          %s489 = smul.addr %s485, 2
          %s490 = smul.addr %s489, 64
          %s491 = scalar_lea.hbm %s0, %s490
          %s492 = sshll.u32 %s484, 4
          %s493 = int_to_ptr.vmem [resolvable:$true] %s492
          %498 = dma.hbm_to_vmem [thread:$0]  %s491, 256, %s493, %s481, 64, 64, 4
        $region64: #{tpu_custom_call.1} parent=59 // pred_fallthru
          _
        // Predicated region
        $region65: #{tpu_custom_call.1} parent=59 // pred_check
          %p499 = pneg %p78
        $region66: #{tpu_custom_call.1} parent=59 // pred_check_branch
          %501 = sbr.rel (%p499) target = $region68
        $region67: #{tpu_custom_call.1} parent=59 // pred_region
          %s502 = sand.u32 %s32, 1
          %s503 = scalar_lea.sflag [#allocation6], %s502
          %s504 = sand.u32 %s68, 1
          %s505 = smul.addr %s504, 2
          %s506 = scalar_lea.vmem [#allocation5], %s505
          %s507 = smul.u32 2, %s32
          %s509 = ssub.s32 32, 32
          %510 = vsyncadd %s503, %s509
          %s511 = smul.addr %s507, 16
          %s512 = scalar_lea.hbm %s1, %s511
          %s513 = sshll.u32 %s506, 4
          %s514 = int_to_ptr.vmem [resolvable:$true] %s513
          %519 = dma.hbm_to_vmem [thread:$0]  %s512, 32, %s514, %s503, 16, 16, 1
        $region68: #{tpu_custom_call.1} parent=59 // pred_fallthru
          _
        // Predicated region
        $region69: #{tpu_custom_call.1} parent=59 // pred_check
          %p520 = pneg %p104
        $region70: #{tpu_custom_call.1} parent=59 // pred_check_branch
          %522 = sbr.rel (%p520) target = $region72
        $region71: #{tpu_custom_call.1} parent=59 // pred_region
          %s523 = sand.u32 %s32, 1
          %s524 = scalar_lea.sflag [#allocation6], %s523
          %s525 = sand.u32 %s94, 1
          %s526 = smul.addr %s525, 16
          %s527 = scalar_lea.vmem [#allocation7], %s526
          %s528 = smul.u32 2, %s32
          %s530 = ssub.s32 256, 256
          %531 = vsyncadd %s524, %s530
          %s532 = smul.addr %s528, 128
          %s533 = scalar_lea.hbm %s2, %s532
          %s534 = sshll.u32 %s527, 4
          %s535 = int_to_ptr.vmem [resolvable:$true] %s534
          %540 = dma.hbm_to_vmem [thread:$0]  %s533, 256, %s535, %s524, 128, 128, 8
        $region72: #{tpu_custom_call.1} parent=59 // pred_fallthru
          _
      $region60: #{tpu_custom_call.1} parent=5 // pred_fallthru
        _
      %p541 = scmp.le.s32.totalorder 1, %s32
      %p542 = scmp.lt.s32.totalorder %s32, 3
      %p543 = pnand %p541, %p542
      %p544 = pneg %p543
      // Predicated region
      $region73: #{tpu_custom_call.1} parent=5 // pred_check
        _
      $region74: #{tpu_custom_call.1} parent=5 // pred_check_branch
        %546 = sbr.rel (%p543) target = $region76
      $region75: #{tpu_custom_call.1} parent=5 // pred_region
        %s547 = ssub.s32 %s32, 1
        %s548 = sand.u32 %s45, 1
        %s549 = scalar_lea.sflag [#allocation3], %s548
        %s550 = sand.u32 %s45, 1
        %s551 = smul.addr %s550, 16
        %s552 = scalar_lea.vmem [#allocation2], %s551
        // Predicated region
        $region77: #{tpu_custom_call.1} parent=75 // pred_check
          %p553 = pneg %p58
        $region78: #{tpu_custom_call.1} parent=75 // pred_check_branch
          %555 = sbr.rel (%p553) target = $region80
        $region79: #{tpu_custom_call.1} parent=75 // pred_region
          %556 = dma.done %s549, 256
        $region80: #{tpu_custom_call.1} parent=75 // pred_fallthru
          _
        %s557 = sand.u32 %s37, 1
        %s558 = scalar_lea.sflag [#allocation6], %s557
        %s559 = sand.u32 %s71, 1
        %s560 = smul.addr %s559, 2
        %s561 = scalar_lea.vmem [#allocation5], %s560
        // Predicated region
        $region81: #{tpu_custom_call.1} parent=75 // pred_check
          %p562 = pneg %p84
        $region82: #{tpu_custom_call.1} parent=75 // pred_check_branch
          %564 = sbr.rel (%p562) target = $region84
        $region83: #{tpu_custom_call.1} parent=75 // pred_region
          %565 = dma.done %s558, 32
        $region84: #{tpu_custom_call.1} parent=75 // pred_fallthru
          _
        %s566 = sand.u32 %s37, 1
        %s567 = scalar_lea.sflag [#allocation6], %s566
        %s568 = sand.u32 %s97, 1
        %s569 = smul.addr %s568, 16
        %s570 = scalar_lea.vmem [#allocation7], %s569
        // Predicated region
        $region85: #{tpu_custom_call.1} parent=75 // pred_check
          %p571 = pneg %p110
        $region86: #{tpu_custom_call.1} parent=75 // pred_check_branch
          %573 = sbr.rel (%p571) target = $region88
        $region87: #{tpu_custom_call.1} parent=75 // pred_region
          %574 = dma.done %s567, 256
        $region88: #{tpu_custom_call.1} parent=75 // pred_fallthru
          _
        // Predicated region
        $region89: #{tpu_custom_call.1} parent=75 // pred_check
          %p575 = pneg %p131
        $region90: #{tpu_custom_call.1} parent=75 // pred_check_branch
          %577 = sbr.rel (%p575) target = $region92
        $region91: #{tpu_custom_call.1} parent=75 // pred_region
          %578 = dma.done [#allocation9], 3072
        $region92: #{tpu_custom_call.1} parent=75 // pred_fallthru
          _
        // Predicated region
        $region93: #{tpu_custom_call.1} parent=75 // pred_check
          %p579 = pneg %p152
        $region94: #{tpu_custom_call.1} parent=75 // pred_check_branch
          %581 = sbr.rel (%p579) target = $region96
        $region95: #{tpu_custom_call.1} parent=75 // pred_region
          %582 = dma.done [#allocation9], 48
        $region96: #{tpu_custom_call.1} parent=75 // pred_fallthru
          _
        // Predicated region
        $region97: #{tpu_custom_call.1} parent=75 // pred_check
          %p583 = pneg %p173
        $region98: #{tpu_custom_call.1} parent=75 // pred_check_branch
          %585 = sbr.rel (%p583) target = $region100
        $region99: #{tpu_custom_call.1} parent=75 // pred_region
          %586 = dma.done [#allocation12], 1024
        $region100: #{tpu_custom_call.1} parent=75 // pred_fallthru
          _
        // Predicated region
        $region101: #{tpu_custom_call.1} parent=75 // pred_check
          %p587 = pneg %p215
        $region102: #{tpu_custom_call.1} parent=75 // pred_check_branch
          %589 = sbr.rel (%p587) target = $region104
        $region103: #{tpu_custom_call.1} parent=75 // pred_region
          %590 = dma.done [#allocation12], 4096
        $region104: #{tpu_custom_call.1} parent=75 // pred_fallthru
          _
        // Predicated region
        $region105: #{tpu_custom_call.1} parent=75 // pred_check
          %p591 = pneg %p257
        $region106: #{tpu_custom_call.1} parent=75 // pred_check_branch
          %593 = sbr.rel (%p591) target = $region108
        $region107: #{tpu_custom_call.1} parent=75 // pred_region
          %594 = dma.done [#allocation15], 4096
        $region108: #{tpu_custom_call.1} parent=75 // pred_fallthru
          _
        // Predicated region
        $region109: #{tpu_custom_call.1} parent=75 // pred_check
          %p595 = pneg %p320
        $region110: #{tpu_custom_call.1} parent=75 // pred_check_branch
          %597 = sbr.rel (%p595) target = $region112
        $region111: #{tpu_custom_call.1} parent=75 // pred_region
          %598 = dma.done [#allocation15], 1024
        $region112: #{tpu_custom_call.1} parent=75 // pred_fallthru
          _
        %s599 = sand.u32 %s45, 1
        %s600 = scalar_lea.sflag [#allocation3], %s599
        %s601 = sand.u32 %s45, 1
        %s602 = smul.addr %s601, 16
        %s603 = scalar_lea.vmem [#allocation2], %s602
        %p604 = pneg %p58
        %p605 = pneg %p55
        %s606 = sand.u32 %s37, 1
        %s607 = scalar_lea.sflag [#allocation6], %s606
        %s608 = sand.u32 %s71, 1
        %s609 = smul.addr %s608, 2
        %s610 = scalar_lea.vmem [#allocation5], %s609
        %p611 = pneg %p84
        %p612 = pneg %p81
        %s613 = sand.u32 %s37, 1
        %s614 = scalar_lea.sflag [#allocation6], %s613
        %s615 = sand.u32 %s97, 1
        %s616 = smul.addr %s615, 16
        %s617 = scalar_lea.vmem [#allocation7], %s616
        %p618 = pneg %p110
        %p619 = pneg %p107
        %p620 = pneg %p131
        %p621 = pneg %p128
        %p622 = pneg %p152
        %p623 = pneg %p149
        %p624 = pneg %p173
        %p625 = pneg %p170
        %p626 = pneg %p194
        %p627 = pneg %p191
        %p628 = pneg %p215
        %p629 = pneg %p212
        %p630 = pneg %p236
        %p631 = pneg %p233
        %p632 = pneg %p257
        %p633 = pneg %p254
        %p634 = pneg %p278
        %p635 = pneg %p275
        %p636 = pneg %p299
        %p637 = pneg %p296
        %p638 = pneg %p320
        %p639 = pneg %p317
        %p640 = pneg %p341
        %p641 = pneg %p338
        %p642 = pneg %p367
        %p643 = pneg %p364
        %s644 = sand.u32 %s354, 1
        %s645 = scalar_lea.sflag [#allocation4], %s644
        %s646 = sand.u32 %s354, 1
        %s647 = smul.addr %s646, 16
        %s648 = scalar_lea.vmem [#allocation17], %s647
        %s649 = smul.u32 2, %s37
        %s650 = smul.u32 2, %s37
        %s651 = smul.u32 2, %s37
        %s652 = smul.u32 2, %s37
        %v654 = vld [vmem:[%s552] sm:$0xf]
        %v655 = vld [vmem:[%s552 + $0x4] sm:$0xf]
        %v656 = vld [vmem:[%s552 + $0x8] sm:$0xf]
        %v657 = vld [vmem:[%s552 + $0xc] sm:$0xf]
        %v658 = vunpack.c.l.bf16 %v654
        %v659 = vunpack.c.l.bf16 %v655
        %v660 = vunpack.c.l.bf16 %v656
        %v661 = vunpack.c.l.bf16 %v657
        %v662 = vld [vmem:[#allocation8] sm:$0xff]
        %v663 = vld [vmem:[#allocation8 + $0x8] sm:$0xf]
        %v664 = vld [vmem:[#allocation8 + $0xc] sm:$0xff]
        %v665 = vld [vmem:[#allocation8 + $0x14] sm:$0xf]
        %v666 = vld [vmem:[#allocation8 + $0x18] sm:$0xff]
        %v667 = vld [vmem:[#allocation8 + $0x20] sm:$0xf]
        %v668 = vld [vmem:[#allocation8 + $0x24] sm:$0xff]
        %v669 = vld [vmem:[#allocation8 + $0x2c] sm:$0xf]
        %v670 = vld [vmem:[#allocation8 + $0x30] sm:$0xff]
        %v671 = vld [vmem:[#allocation8 + $0x38] sm:$0xf]
        %v672 = vld [vmem:[#allocation8 + $0x3c] sm:$0xff]
        %v673 = vld [vmem:[#allocation8 + $0x44] sm:$0xf]
        %v674 = vld [vmem:[#allocation8 + $0x48] sm:$0xff]
        %v675 = vld [vmem:[#allocation8 + $0x50] sm:$0xf]
        %v676 = vld [vmem:[#allocation8 + $0x54] sm:$0xff]
        %v677 = vld [vmem:[#allocation8 + $0x5c] sm:$0xf]
        %v678 = vld [vmem:[#allocation8 + $0x60] sm:$0xff]
        %v679 = vld [vmem:[#allocation8 + $0x68] sm:$0xf]
        %v680 = vld [vmem:[#allocation8 + $0x6c] sm:$0xff]
        %v681 = vld [vmem:[#allocation8 + $0x74] sm:$0xf]
        %v682 = vld [vmem:[#allocation8 + $0x78] sm:$0xff]
        %v683 = vld [vmem:[#allocation8 + $0x80] sm:$0xf]
        %v684 = vld [vmem:[#allocation8 + $0x84] sm:$0xff]
        %v685 = vld [vmem:[#allocation8 + $0x8c] sm:$0xf]
        %v686 = vld [vmem:[#allocation8 + $0x90] sm:$0xff]
        %v687 = vld [vmem:[#allocation8 + $0x98] sm:$0xf]
        %v688 = vld [vmem:[#allocation8 + $0x9c] sm:$0xff]
        %v689 = vld [vmem:[#allocation8 + $0xa4] sm:$0xf]
        %v690 = vld [vmem:[#allocation8 + $0xa8] sm:$0xff]
        %v691 = vld [vmem:[#allocation8 + $0xb0] sm:$0xf]
        %v692 = vld [vmem:[#allocation8 + $0xb4] sm:$0xff]
        %v693 = vld [vmem:[#allocation8 + $0xbc] sm:$0xf]
        %v694 = vld [vmem:[#allocation10] sm:$0x7]
        %v696 = vlaneseq
        %v697 = vshrl.u32 %v696, 7
        %v698 = vsub.s32 0, %v697
        %v699 = vrot.slane %v694, %v698
        %v700 = vlaneseq
        %v701 = vshrl.u32 %v700, 7
        %v702 = vsub.s32 1, %v701
        %v703 = vrot.slane %v694, %v702
        %v704 = vlaneseq
        %v705 = vshrl.u32 %v704, 7
        %v706 = vsub.s32 2, %v705
        %v707 = vrot.slane %v694, %v706
        %v715 = vunpack.c.l.b16 %v654
        %v716 = vunpack.c.l.b16 %v655
        %v717 = vunpack.c.l.b16 %v656
        %v718 = vunpack.c.l.b16 %v657
        %v719 = vpack.c.b16 %v716, %v715
        %v720 = vpack.c.b16 %v718, %v717
        %v755 = vunpack.c.l.b16 %v662
        %v756 = vunpack.c.h.b16 %v662
        %v757 = vunpack.c.l.b16 %v663
        %v758 = vunpack.c.l.b16 %v664
        %v759 = vunpack.c.h.b16 %v664
        %v760 = vunpack.c.l.b16 %v665
        %v761 = vunpack.c.l.b16 %v666
        %v762 = vunpack.c.h.b16 %v666
        %v763 = vunpack.c.l.b16 %v667
        %v764 = vunpack.c.l.b16 %v668
        %v765 = vunpack.c.h.b16 %v668
        %v766 = vunpack.c.l.b16 %v669
        %v767 = vunpack.c.l.b16 %v670
        %v768 = vunpack.c.h.b16 %v670
        %v769 = vunpack.c.l.b16 %v671
        %v770 = vunpack.c.l.b16 %v672
        %v771 = vunpack.c.h.b16 %v672
        %v772 = vunpack.c.l.b16 %v673
        %v773 = vunpack.c.l.b16 %v674
        %v774 = vunpack.c.h.b16 %v674
        %v775 = vunpack.c.l.b16 %v675
        %v776 = vunpack.c.l.b16 %v676
        %v777 = vunpack.c.h.b16 %v676
        %v778 = vunpack.c.l.b16 %v677
        %v779 = vunpack.c.l.b16 %v678
        %v780 = vunpack.c.h.b16 %v678
        %v781 = vunpack.c.l.b16 %v679
        %v782 = vunpack.c.l.b16 %v680
        %v783 = vunpack.c.h.b16 %v680
        %v784 = vunpack.c.l.b16 %v681
        %v785 = vunpack.c.l.b16 %v682
        %v786 = vunpack.c.h.b16 %v682
        %v787 = vunpack.c.l.b16 %v683
        %v788 = vunpack.c.l.b16 %v684
        %v789 = vunpack.c.h.b16 %v684
        %v790 = vunpack.c.l.b16 %v685
        %v791 = vunpack.c.l.b16 %v686
        %v792 = vunpack.c.h.b16 %v686
        %v793 = vunpack.c.l.b16 %v687
        %v794 = vunpack.c.l.b16 %v688
        %v795 = vunpack.c.h.b16 %v688
        %v796 = vunpack.c.l.b16 %v689
        %v797 = vunpack.c.l.b16 %v690
        %v798 = vunpack.c.h.b16 %v690
        %v799 = vunpack.c.l.b16 %v691
        %v800 = vunpack.c.l.b16 %v692
        %v801 = vunpack.c.h.b16 %v692
        %v802 = vunpack.c.l.b16 %v693
        %v803 = vpack.c.b16 %v758, %v755
        %v804 = vpack.c.b16 %v759, %v756
        %v805 = vpack.c.b16 %v760, %v757
        %v806 = vpack.c.b16 %v764, %v761
        %v807 = vpack.c.b16 %v765, %v762
        %v808 = vpack.c.b16 %v766, %v763
        %v809 = vpack.c.b16 %v770, %v767
        %v810 = vpack.c.b16 %v771, %v768
        %v811 = vpack.c.b16 %v772, %v769
        %v812 = vpack.c.b16 %v776, %v773
        %v813 = vpack.c.b16 %v777, %v774
        %v814 = vpack.c.b16 %v778, %v775
        %v815 = vpack.c.b16 %v782, %v779
        %v816 = vpack.c.b16 %v783, %v780
        %v817 = vpack.c.b16 %v784, %v781
        %v818 = vpack.c.b16 %v788, %v785
        %v819 = vpack.c.b16 %v789, %v786
        %v820 = vpack.c.b16 %v790, %v787
        %v821 = vpack.c.b16 %v794, %v791
        %v822 = vpack.c.b16 %v795, %v792
        %v823 = vpack.c.b16 %v796, %v793
        %v824 = vpack.c.b16 %v800, %v797
        %v825 = vpack.c.b16 %v801, %v798
        %v826 = vpack.c.b16 %v802, %v799
        %851 = vmatprep.subr.bf16.mxu0 %v825
        %852 = vmatpush1.bf16.msra.mxu0 %v824
        %853 = vmatprep.subr.bf16.mxu0 %v822
        %854 = vmatpush1.bf16.msra.mxu0 %v821
        %855 = vmatprep.subr.bf16.mxu0 %v819
        %856 = vmatpush1.bf16.msra.mxu0 %v818
        %857 = vmatprep.subr.bf16.mxu0 %v816
        %858 = vmatpush1.bf16.msra.mxu0 %v815
        %859 = vmatprep.subr.bf16.mxu0 %v813
        %860 = vmatpush1.bf16.msra.mxu0 %v812
        %861 = vmatprep.subr.bf16.mxu0 %v810
        %862 = vmatpush1.bf16.msra.mxu0 %v809
        %863 = vmatprep.subr.bf16.mxu0 %v807
        %864 = vmatpush1.bf16.msra.mxu0 %v806
        %865 = vmatprep.subr.bf16.mxu0 %v804
        %866 = vmatpush1.bf16.msra.mxu0 %v803
        %867 = vmatprep.subr.bf16.mxu0 0
        %868 = vmatpush2.bf16.msra.mxu0 0
        %869 = vmatprep.subr.bf16.mxu0 0
        %870 = vmatpush2.bf16.msra.mxu0 0
        %871 = vmatprep.subr.bf16.mxu0 0
        %872 = vmatpush2.bf16.msra.mxu0 0
        %873 = vmatprep.subr.bf16.mxu0 0
        %874 = vmatpush2.bf16.msra.mxu0 0
        %875 = vmatprep.subr.bf16.mxu0 0
        %876 = vmatpush2.bf16.msra.mxu0 0
        %877 = vmatprep.subr.bf16.mxu0 0
        %878 = vmatpush2.bf16.msra.mxu0 0
        %879 = vmatprep.subr.bf16.mxu0 0
        %880 = vmatpush2.bf16.msra.mxu0 0
        %881 = vmatprep.subr.bf16.mxu0 0
        %882 = vmatpush2.bf16.msra.mxu0 0
        %883 = vmatprep.mubr.bf16.mxu0 0
        %884 = vmatmul.mubr.bf16.gmra.mxu0 %v719
        %v885 = vpop.f32.mrf.mxu0
        %v886 = vadd.f32 %v699, %v885
        %v887 = vpop.f32.mrf.mxu0
        %v888 = vadd.f32 %v703, %v887
        %v889 = vpop.f32.mrf.mxu0
        %v890 = vadd.f32 %v699, %v889
        %v891 = vpop.f32.mrf.mxu0
        %v892 = vadd.f32 %v703, %v891
        %893 = vmatprep.mubr.bf16.mxu0 0
        %894 = vmatmul.mubr.bf16.gmra.mxu0 %v720
        %v895 = vpop.f32.mrf.mxu0
        %v896 = vadd.f32 %v699, %v895
        %v897 = vpop.f32.mrf.mxu0
        %v898 = vadd.f32 %v703, %v897
        %v899 = vpop.f32.mrf.mxu0
        %v900 = vadd.f32 %v699, %v899
        %v901 = vpop.f32.mrf.mxu0
        %v902 = vadd.f32 %v703, %v901
        %903 = vdwg.mxu0
        %904 = vmatprep.subr.bf16.mxu0 0
        %905 = vmatpush1.bf16.msra.mxu0 %v826
        %906 = vmatprep.subr.bf16.mxu0 0
        %907 = vmatpush1.bf16.msra.mxu0 %v823
        %908 = vmatprep.subr.bf16.mxu0 0
        %909 = vmatpush1.bf16.msra.mxu0 %v820
        %910 = vmatprep.subr.bf16.mxu0 0
        %911 = vmatpush1.bf16.msra.mxu0 %v817
        %912 = vmatprep.subr.bf16.mxu0 0
        %913 = vmatpush1.bf16.msra.mxu0 %v814
        %914 = vmatprep.subr.bf16.mxu0 0
        %915 = vmatpush1.bf16.msra.mxu0 %v811
        %916 = vmatprep.subr.bf16.mxu0 0
        %917 = vmatpush1.bf16.msra.mxu0 %v808
        %918 = vmatprep.subr.bf16.mxu0 0
        %919 = vmatpush1.bf16.msra.mxu0 %v805
        %920 = vmatprep.subr.bf16.mxu0 0
        %921 = vmatpush2.bf16.msra.mxu0 0
        %922 = vmatprep.subr.bf16.mxu0 0
        %923 = vmatpush2.bf16.msra.mxu0 0
        %924 = vmatprep.subr.bf16.mxu0 0
        %925 = vmatpush2.bf16.msra.mxu0 0
        %926 = vmatprep.subr.bf16.mxu0 0
        %927 = vmatpush2.bf16.msra.mxu0 0
        %928 = vmatprep.subr.bf16.mxu0 0
        %929 = vmatpush2.bf16.msra.mxu0 0
        %930 = vmatprep.subr.bf16.mxu0 0
        %931 = vmatpush2.bf16.msra.mxu0 0
        %932 = vmatprep.subr.bf16.mxu0 0
        %933 = vmatpush2.bf16.msra.mxu0 0
        %934 = vmatprep.subr.bf16.mxu0 0
        %935 = vmatpush2.bf16.msra.mxu0 0
        %936 = vmatprep.mubr.bf16.mxu0 0
        %937 = vmatmul.mubr.bf16.gmra.mxu0 %v719
        %v938 = vpop.f32.mrf.mxu0
        %v939 = vadd.f32 %v707, %v938
        %v940 = vpop.f32.mrf.mxu0
        %v941 = vpop.f32.mrf.mxu0
        %v942 = vadd.f32 %v707, %v941
        %v943 = vpop.f32.mrf.mxu0
        %944 = vmatprep.mubr.bf16.mxu0 0
        %945 = vmatmul.mubr.bf16.gmra.mxu0 %v720
        %v946 = vpop.f32.mrf.mxu0
        %v947 = vadd.f32 %v707, %v946
        %v948 = vpop.f32.mrf.mxu0
        %v949 = vpop.f32.mrf.mxu0
        %v950 = vadd.f32 %v707, %v949
        %v951 = vpop.f32.mrf.mxu0
        %952 = vdwg.mxu0
        %v953 = vpack.c.bf16 %v890, %v886
        %v954 = vpack.c.bf16 %v900, %v896
        %v955 = vpack.c.bf16 %v892, %v888
        %v956 = vpack.c.bf16 %v902, %v898
        %957 = vmatprep.subr.bf16.mxu0 0
        %958 = vmatpush1.bf16.xpose.msra.mxu0 0
        %959 = vmatprep.subr.bf16.mxu0 0
        %960 = vmatpush1.bf16.xpose.msra.mxu0 0
        %961 = vmatprep.subr.bf16.mxu0 0
        %962 = vmatpush1.bf16.xpose.msra.mxu0 0
        %963 = vmatprep.subr.bf16.mxu0 0
        %964 = vmatpush1.bf16.xpose.msra.mxu0 0
        %965 = vmatprep.subr.bf16.mxu0 0
        %966 = vmatpush1.bf16.xpose.msra.mxu0 0
        %967 = vmatprep.subr.bf16.mxu0 0
        %968 = vmatpush1.bf16.xpose.msra.mxu0 0
        %969 = vmatprep.subr.bf16.mxu0 0
        %970 = vmatpush1.bf16.xpose.msra.mxu0 0
        %971 = vmatprep.subr.bf16.mxu0 0
        %972 = vmatpush1.bf16.xpose.msra.mxu0 %v955
        %973 = vmatprep.subr.bf16.mxu0 0
        %974 = vmatpush2.bf16.xpose.msra.mxu0 0
        %975 = vmatprep.subr.bf16.mxu0 0
        %976 = vmatpush2.bf16.xpose.msra.mxu0 0
        %977 = vmatprep.subr.bf16.mxu0 0
        %978 = vmatpush2.bf16.xpose.msra.mxu0 0
        %979 = vmatprep.subr.bf16.mxu0 0
        %980 = vmatpush2.bf16.xpose.msra.mxu0 0
        %981 = vmatprep.subr.bf16.mxu0 0
        %982 = vmatpush2.bf16.xpose.msra.mxu0 0
        %983 = vmatprep.subr.bf16.mxu0 0
        %984 = vmatpush2.bf16.xpose.msra.mxu0 0
        %985 = vmatprep.subr.bf16.mxu0 0
        %986 = vmatpush2.bf16.xpose.msra.mxu0 0
        %987 = vmatprep.subr.bf16.mxu0 0
        %988 = vmatpush2.bf16.xpose.msra.mxu0 0
        %989 = vmatprep.mubr.bf16.mxu0 0
        %990 = vmatmul.mubr.bf16.gmra.mxu0 %v953
        %v991 = vpop.f32.mrf.mxu0
        %v992 = vadd.f32 0.0, %v991
        %v993 = vpop.f32.mrf.mxu0
        %v994 = vpop.f32.mrf.mxu0
        %v995 = vadd.f32 0.0, %v994
        %v996 = vpop.f32.mrf.mxu0
        %997 = vdwg.mxu0
        %998 = vmatprep.subr.bf16.mxu0 0
        %999 = vmatpush1.bf16.xpose.msra.mxu0 0
        %1000 = vmatprep.subr.bf16.mxu0 0
        %1001 = vmatpush1.bf16.xpose.msra.mxu0 0
        %1002 = vmatprep.subr.bf16.mxu0 0
        %1003 = vmatpush1.bf16.xpose.msra.mxu0 0
        %1004 = vmatprep.subr.bf16.mxu0 0
        %1005 = vmatpush1.bf16.xpose.msra.mxu0 0
        %1006 = vmatprep.subr.bf16.mxu0 0
        %1007 = vmatpush1.bf16.xpose.msra.mxu0 0
        %1008 = vmatprep.subr.bf16.mxu0 0
        %1009 = vmatpush1.bf16.xpose.msra.mxu0 0
        %1010 = vmatprep.subr.bf16.mxu0 0
        %1011 = vmatpush1.bf16.xpose.msra.mxu0 0
        %1012 = vmatprep.subr.bf16.mxu0 0
        %1013 = vmatpush1.bf16.xpose.msra.mxu0 %v956
        %1014 = vmatprep.subr.bf16.mxu0 0
        %1015 = vmatpush2.bf16.xpose.msra.mxu0 0
        %1016 = vmatprep.subr.bf16.mxu0 0
        %1017 = vmatpush2.bf16.xpose.msra.mxu0 0
        %1018 = vmatprep.subr.bf16.mxu0 0
        %1019 = vmatpush2.bf16.xpose.msra.mxu0 0
        %1020 = vmatprep.subr.bf16.mxu0 0
        %1021 = vmatpush2.bf16.xpose.msra.mxu0 0
        %1022 = vmatprep.subr.bf16.mxu0 0
        %1023 = vmatpush2.bf16.xpose.msra.mxu0 0
        %1024 = vmatprep.subr.bf16.mxu0 0
        %1025 = vmatpush2.bf16.xpose.msra.mxu0 0
        %1026 = vmatprep.subr.bf16.mxu0 0
        %1027 = vmatpush2.bf16.xpose.msra.mxu0 0
        %1028 = vmatprep.subr.bf16.mxu0 0
        %1029 = vmatpush2.bf16.xpose.msra.mxu0 0
        %1030 = vmatprep.mubr.bf16.mxu0 0
        %1031 = vmatmul.mubr.bf16.gmra.mxu0 %v954
        %v1032 = vpop.f32.mrf.mxu0
        %v1033 = vadd.f32 0.0, %v1032
        %v1034 = vpop.f32.mrf.mxu0
        %v1035 = vpop.f32.mrf.mxu0
        %v1036 = vadd.f32 0.0, %v1035
        %v1037 = vpop.f32.mrf.mxu0
        %1038 = vdwg.mxu0
        %v1039 = vmul.f32 %v992, 0.088388346
        %v1040 = vmul.f32 %v995, 0.088388346
        %v1041 = vmul.f32 %v1033, 0.088388346
        %v1042 = vmul.f32 %v1036, 0.088388346
        %v1043 = vld [vmem:[%s561] sm:$0x1]
        %v1044 = vld [vmem:[%s561 + $0x1] sm:$0x1]
        %v1047 = vlaneseq
        %v1048 = vshrl.u32 %v1047, 7
        %v1049 = vsub.s32 0, %v1048
        %v1050 = vrot.slane %v1043, %v1049
        %v1051 = vlaneseq
        %v1052 = vshrl.u32 %v1051, 7
        %v1053 = vsub.s32 0, %v1052
        %v1054 = vrot.slane %v1044, %v1053
        %v1057 = vadd.f32 %v1039, %v1050
        %v1058 = vadd.f32 %v1040, %v1050
        %v1059 = vadd.f32 %v1041, %v1054
        %v1060 = vadd.f32 %v1042, %v1054
        %vm1061 = vcmask 130048
        %v1062 = vsel %vm1061, %v1057, -inf
        %1063 = vmax.xlane.f32.xlu0 %v1062
        %v1064 = vpop.xlane.xlu0 %1063
        %v1065 = vsel %vm1061, %v1058, -inf
        %1066 = vmax.xlane.f32.xlu0 %v1065
        %v1067 = vpop.xlane.xlu0 %1066
        %v1068 = vsel %vm1061, %v1059, -inf
        %1069 = vmax.xlane.f32.xlu0 %v1068
        %v1070 = vpop.xlane.xlu0 %1069
        %v1071 = vsel %vm1061, %v1060, -inf
        %1072 = vmax.xlane.f32.xlu0 %v1071
        %v1073 = vpop.xlane.xlu0 %1072
        %v1074 = vsub.f32 %v1057, %v1064
        %v1075 = vsub.f32 %v1058, %v1067
        %v1076 = vsub.f32 %v1059, %v1070
        %v1077 = vsub.f32 %v1060, %v1073
        %v1078 = vmul.f32 %v1074, 1.442695
        %v1079 = vpow.pop %v1078
        %v1080 = vmul.f32 %v1075, 1.442695
        %v1081 = vpow.pop %v1080
        %v1082 = vmul.f32 %v1076, 1.442695
        %v1083 = vpow.pop %v1082
        %v1084 = vmul.f32 %v1077, 1.442695
        %v1085 = vpow.pop %v1084
        %v1086 = vsel %vm1061, %v1079, 0.0
        %1087 = vadd.xlane.f32.xlu0 %v1086
        %v1088 = vpop.xlane.xlu0 %1087
        %v1089 = vsel %vm1061, %v1081, 0.0
        %1090 = vadd.xlane.f32.xlu0 %v1089
        %v1091 = vpop.xlane.xlu0 %1090
        %v1092 = vsel %vm1061, %v1083, 0.0
        %1093 = vadd.xlane.f32.xlu0 %v1092
        %v1094 = vpop.xlane.xlu0 %1093
        %v1095 = vsel %vm1061, %v1085, 0.0
        %1096 = vadd.xlane.f32.xlu0 %v1095
        %v1097 = vpop.xlane.xlu0 %1096
        %v1098 = vrcp.pop %v1088
        %v1099 = vrcp.pop %v1091
        %v1100 = vrcp.pop %v1094
        %v1101 = vrcp.pop %v1097
        %v1102 = vmul.f32 %v1079, %v1098
        %v1103 = vmul.f32 %v1081, %v1099
        %v1104 = vmul.f32 %v1083, %v1100
        %v1105 = vmul.f32 %v1085, %v1101
        %v1106 = vpack.c.bf16 %v1103, %v1102
        %v1107 = vpack.c.bf16 %v1105, %v1104
        %v1108 = vpack.c.bf16 %v942, %v939
        %v1109 = vpack.c.bf16 %v950, %v947
        %v1111 = vsel %vm1061, %v1106, 0
        %1113 = vmatprep.subr.bf16.mxu0 0
        %1114 = vmatpush1.bf16.msra.mxu0 0
        %1115 = vmatprep.subr.bf16.mxu0 0
        %1116 = vmatpush1.bf16.msra.mxu0 0
        %1117 = vmatprep.subr.bf16.mxu0 0
        %1118 = vmatpush1.bf16.msra.mxu0 0
        %1119 = vmatprep.subr.bf16.mxu0 0
        %1120 = vmatpush1.bf16.msra.mxu0 0
        %1121 = vmatprep.subr.bf16.mxu0 0
        %1122 = vmatpush1.bf16.msra.mxu0 0
        %1123 = vmatprep.subr.bf16.mxu0 0
        %1124 = vmatpush1.bf16.msra.mxu0 0
        %1125 = vmatprep.subr.bf16.mxu0 0
        %1126 = vmatpush1.bf16.msra.mxu0 0
        %1127 = vmatprep.subr.bf16.mxu0 0
        %1128 = vmatpush1.bf16.msra.mxu0 %v1108
        %1129 = vmatprep.subr.bf16.mxu0 0
        %1130 = vmatpush2.bf16.msra.mxu0 0
        %1131 = vmatprep.subr.bf16.mxu0 0
        %1132 = vmatpush2.bf16.msra.mxu0 0
        %1133 = vmatprep.subr.bf16.mxu0 0
        %1134 = vmatpush2.bf16.msra.mxu0 0
        %1135 = vmatprep.subr.bf16.mxu0 0
        %1136 = vmatpush2.bf16.msra.mxu0 0
        %1137 = vmatprep.subr.bf16.mxu0 0
        %1138 = vmatpush2.bf16.msra.mxu0 0
        %1139 = vmatprep.subr.bf16.mxu0 0
        %1140 = vmatpush2.bf16.msra.mxu0 0
        %1141 = vmatprep.subr.bf16.mxu0 0
        %1142 = vmatpush2.bf16.msra.mxu0 0
        %1143 = vmatprep.subr.bf16.mxu0 0
        %1144 = vmatpush2.bf16.msra.mxu0 0
        %1145 = vmatprep.mubr.bf16.mxu0 0
        %1146 = vmatmul.mubr.bf16.gmra.mxu0 %v1111
        %v1147 = vpop.f32.mrf.mxu0
        %v1148 = vadd.f32 0.0, %v1147
        %v1149 = vpop.f32.mrf.mxu0
        %v1150 = vpop.f32.mrf.mxu0
        %v1151 = vadd.f32 0.0, %v1150
        %v1152 = vpop.f32.mrf.mxu0
        %1153 = vdwg.mxu0
        %v1155 = vsel %vm1061, %v1107, 0
        %1157 = vmatprep.subr.bf16.mxu0 0
        %1158 = vmatpush1.bf16.msra.mxu0 0
        %1159 = vmatprep.subr.bf16.mxu0 0
        %1160 = vmatpush1.bf16.msra.mxu0 0
        %1161 = vmatprep.subr.bf16.mxu0 0
        %1162 = vmatpush1.bf16.msra.mxu0 0
        %1163 = vmatprep.subr.bf16.mxu0 0
        %1164 = vmatpush1.bf16.msra.mxu0 0
        %1165 = vmatprep.subr.bf16.mxu0 0
        %1166 = vmatpush1.bf16.msra.mxu0 0
        %1167 = vmatprep.subr.bf16.mxu0 0
        %1168 = vmatpush1.bf16.msra.mxu0 0
        %1169 = vmatprep.subr.bf16.mxu0 0
        %1170 = vmatpush1.bf16.msra.mxu0 0
        %1171 = vmatprep.subr.bf16.mxu0 0
        %1172 = vmatpush1.bf16.msra.mxu0 %v1109
        %1173 = vmatprep.subr.bf16.mxu0 0
        %1174 = vmatpush2.bf16.msra.mxu0 0
        %1175 = vmatprep.subr.bf16.mxu0 0
        %1176 = vmatpush2.bf16.msra.mxu0 0
        %1177 = vmatprep.subr.bf16.mxu0 0
        %1178 = vmatpush2.bf16.msra.mxu0 0
        %1179 = vmatprep.subr.bf16.mxu0 0
        %1180 = vmatpush2.bf16.msra.mxu0 0
        %1181 = vmatprep.subr.bf16.mxu0 0
        %1182 = vmatpush2.bf16.msra.mxu0 0
        %1183 = vmatprep.subr.bf16.mxu0 0
        %1184 = vmatpush2.bf16.msra.mxu0 0
        %1185 = vmatprep.subr.bf16.mxu0 0
        %1186 = vmatpush2.bf16.msra.mxu0 0
        %1187 = vmatprep.subr.bf16.mxu0 0
        %1188 = vmatpush2.bf16.msra.mxu0 0
        %1189 = vmatprep.mubr.bf16.mxu0 0
        %1190 = vmatmul.mubr.bf16.gmra.mxu0 %v1155
        %v1191 = vpop.f32.mrf.mxu0
        %v1192 = vadd.f32 0.0, %v1191
        %v1193 = vpop.f32.mrf.mxu0
        %v1194 = vpop.f32.mrf.mxu0
        %v1195 = vadd.f32 0.0, %v1194
        %v1196 = vpop.f32.mrf.mxu0
        %1197 = vdwg.mxu0
        %v1198 = vpack.c.bf16 %v1151, %v1148
        %v1199 = vpack.c.bf16 %v1195, %v1192
        %v1200 = vld [vmem:[#allocation11] sm:$0xf]
        %v1201 = vld [vmem:[#allocation11 + $0x4] sm:$0xf]
        %v1202 = vld [vmem:[#allocation11 + $0x8] sm:$0xf]
        %v1203 = vld [vmem:[#allocation11 + $0xc] sm:$0xf]
        %v1204 = vld [vmem:[#allocation11 + $0x10] sm:$0xf]
        %v1205 = vld [vmem:[#allocation11 + $0x14] sm:$0xf]
        %v1206 = vld [vmem:[#allocation11 + $0x18] sm:$0xf]
        %v1207 = vld [vmem:[#allocation11 + $0x1c] sm:$0xf]
        %v1208 = vld [vmem:[#allocation11 + $0x20] sm:$0xf]
        %v1209 = vld [vmem:[#allocation11 + $0x24] sm:$0xf]
        %v1210 = vld [vmem:[#allocation11 + $0x28] sm:$0xf]
        %v1211 = vld [vmem:[#allocation11 + $0x2c] sm:$0xf]
        %v1212 = vld [vmem:[#allocation11 + $0x30] sm:$0xf]
        %v1213 = vld [vmem:[#allocation11 + $0x34] sm:$0xf]
        %v1214 = vld [vmem:[#allocation11 + $0x38] sm:$0xf]
        %v1215 = vld [vmem:[#allocation11 + $0x3c] sm:$0xf]
        %v1216 = vld [vmem:[%s6] sm:$0x1]
        %v1218 = vlaneseq
        %v1219 = vshrl.u32 %v1218, 7
        %v1220 = vsub.s32 0, %v1219
        %v1221 = vrot.slane %v1216, %v1220
        %v1239 = vunpack.c.l.b16 %v1200
        %v1240 = vunpack.c.l.b16 %v1201
        %v1241 = vunpack.c.l.b16 %v1202
        %v1242 = vunpack.c.l.b16 %v1203
        %v1243 = vunpack.c.l.b16 %v1204
        %v1244 = vunpack.c.l.b16 %v1205
        %v1245 = vunpack.c.l.b16 %v1206
        %v1246 = vunpack.c.l.b16 %v1207
        %v1247 = vunpack.c.l.b16 %v1208
        %v1248 = vunpack.c.l.b16 %v1209
        %v1249 = vunpack.c.l.b16 %v1210
        %v1250 = vunpack.c.l.b16 %v1211
        %v1251 = vunpack.c.l.b16 %v1212
        %v1252 = vunpack.c.l.b16 %v1213
        %v1253 = vunpack.c.l.b16 %v1214
        %v1254 = vunpack.c.l.b16 %v1215
        %v1255 = vpack.c.b16 %v1240, %v1239
        %v1256 = vpack.c.b16 %v1242, %v1241
        %v1257 = vpack.c.b16 %v1244, %v1243
        %v1258 = vpack.c.b16 %v1246, %v1245
        %v1259 = vpack.c.b16 %v1248, %v1247
        %v1260 = vpack.c.b16 %v1250, %v1249
        %v1261 = vpack.c.b16 %v1252, %v1251
        %v1262 = vpack.c.b16 %v1254, %v1253
        %1271 = vmatprep.subr.bf16.mxu0 0
        %1272 = vmatpush1.bf16.msra.mxu0 %v1262
        %1273 = vmatprep.subr.bf16.mxu0 0
        %1274 = vmatpush1.bf16.msra.mxu0 %v1261
        %1275 = vmatprep.subr.bf16.mxu0 0
        %1276 = vmatpush1.bf16.msra.mxu0 %v1260
        %1277 = vmatprep.subr.bf16.mxu0 0
        %1278 = vmatpush1.bf16.msra.mxu0 %v1259
        %1279 = vmatprep.subr.bf16.mxu0 0
        %1280 = vmatpush1.bf16.msra.mxu0 %v1258
        %1281 = vmatprep.subr.bf16.mxu0 0
        %1282 = vmatpush1.bf16.msra.mxu0 %v1257
        %1283 = vmatprep.subr.bf16.mxu0 0
        %1284 = vmatpush1.bf16.msra.mxu0 %v1256
        %1285 = vmatprep.subr.bf16.mxu0 0
        %1286 = vmatpush1.bf16.msra.mxu0 %v1255
        %1287 = vmatprep.subr.bf16.mxu0 0
        %1288 = vmatpush2.bf16.msra.mxu0 0
        %1289 = vmatprep.subr.bf16.mxu0 0
        %1290 = vmatpush2.bf16.msra.mxu0 0
        %1291 = vmatprep.subr.bf16.mxu0 0
        %1292 = vmatpush2.bf16.msra.mxu0 0
        %1293 = vmatprep.subr.bf16.mxu0 0
        %1294 = vmatpush2.bf16.msra.mxu0 0
        %1295 = vmatprep.subr.bf16.mxu0 0
        %1296 = vmatpush2.bf16.msra.mxu0 0
        %1297 = vmatprep.subr.bf16.mxu0 0
        %1298 = vmatpush2.bf16.msra.mxu0 0
        %1299 = vmatprep.subr.bf16.mxu0 0
        %1300 = vmatpush2.bf16.msra.mxu0 0
        %1301 = vmatprep.subr.bf16.mxu0 0
        %1302 = vmatpush2.bf16.msra.mxu0 0
        %1303 = vmatprep.mubr.bf16.mxu0 0
        %1304 = vmatmul.mubr.bf16.gmra.mxu0 %v1198
        %v1305 = vpop.f32.mrf.mxu0
        %v1306 = vadd.f32 %v1221, %v1305
        %v1307 = vpop.f32.mrf.mxu0
        %v1308 = vpop.f32.mrf.mxu0
        %v1309 = vadd.f32 %v1221, %v1308
        %v1310 = vpop.f32.mrf.mxu0
        %1311 = vmatprep.mubr.bf16.mxu0 0
        %1312 = vmatmul.mubr.bf16.gmra.mxu0 %v1199
        %v1313 = vpop.f32.mrf.mxu0
        %v1314 = vadd.f32 %v1221, %v1313
        %v1315 = vpop.f32.mrf.mxu0
        %v1316 = vpop.f32.mrf.mxu0
        %v1317 = vadd.f32 %v1221, %v1316
        %v1318 = vpop.f32.mrf.mxu0
        %1319 = vdwg.mxu0
        %v1320 = vld [vmem:[%s11] sm:$0x3]
        %v1321 = vld [vmem:[%s11 + $0x2] sm:$0x3]
        %v1322 = vadd.f32 %v658, %v1306
        %v1323 = vadd.f32 %v659, %v1309
        %v1324 = vadd.f32 %v660, %v1314
        %v1325 = vadd.f32 %v661, %v1317
        %1326 = vadd.xlane.f32.xlu0 %v1322
        %v1327 = vpop.xlane.xlu0 %1326
        %1328 = vadd.xlane.f32.xlu0 %v1323
        %v1329 = vpop.xlane.xlu0 %1328
        %1330 = vadd.xlane.f32.xlu0 %v1324
        %v1331 = vpop.xlane.xlu0 %1330
        %1332 = vadd.xlane.f32.xlu0 %v1325
        %v1333 = vpop.xlane.xlu0 %1332
        %v1334 = vrcp.pop 128.0
        %v1335 = vmul.f32 %v1327, %v1334
        %v1336 = vmul.f32 %v1329, %v1334
        %v1337 = vmul.f32 %v1331, %v1334
        %v1338 = vmul.f32 %v1333, %v1334
        %v1339 = vsub.f32 %v1322, %v1335
        %v1340 = vsub.f32 %v1323, %v1336
        %v1341 = vsub.f32 %v1324, %v1337
        %v1342 = vsub.f32 %v1325, %v1338
        %v1343 = vmul.f32 %v1339, %v1339
        %v1344 = vmul.f32 %v1340, %v1340
        %v1345 = vmul.f32 %v1341, %v1341
        %v1346 = vmul.f32 %v1342, %v1342
        %1347 = vadd.xlane.f32.xlu0 %v1343
        %v1348 = vpop.xlane.xlu0 %1347
        %1349 = vadd.xlane.f32.xlu0 %v1344
        %v1350 = vpop.xlane.xlu0 %1349
        %1351 = vadd.xlane.f32.xlu0 %v1345
        %v1352 = vpop.xlane.xlu0 %1351
        %1353 = vadd.xlane.f32.xlu0 %v1346
        %v1354 = vpop.xlane.xlu0 %1353
        %v1355 = vmul.f32 %v1348, %v1334
        %v1356 = vmul.f32 %v1350, %v1334
        %v1357 = vmul.f32 %v1352, %v1334
        %v1358 = vmul.f32 %v1354, %v1334
        %v1359 = vadd.f32 %v1355, 1e-12
        %v1360 = vadd.f32 %v1356, 1e-12
        %v1361 = vadd.f32 %v1357, 1e-12
        %v1362 = vadd.f32 %v1358, 1e-12
        %v1363 = vrsqrt.pop %v1359
        %v1364 = vrsqrt.pop %v1360
        %v1365 = vrsqrt.pop %v1361
        %v1366 = vrsqrt.pop %v1362
        %v1367 = vmul.f32 %v1339, %v1363
        %v1368 = vmul.f32 %v1340, %v1364
        %v1369 = vmul.f32 %v1341, %v1365
        %v1370 = vmul.f32 %v1342, %v1366
        %v1371 = vlaneseq
        %v1372 = vshrl.u32 %v1371, 7
        %v1373 = vsub.s32 0, %v1372
        %v1374 = vrot.slane %v1320, %v1373
        %v1375 = vmul.f32 %v1367, %v1374
        %v1376 = vmul.f32 %v1368, %v1374
        %v1377 = vmul.f32 %v1369, %v1374
        %v1378 = vmul.f32 %v1370, %v1374
        %v1379 = vlaneseq
        %v1380 = vshrl.u32 %v1379, 7
        %v1381 = vsub.s32 1, %v1380
        %v1382 = vrot.slane %v1320, %v1381
        %v1383 = vadd.f32 %v1375, %v1382
        %v1384 = vadd.f32 %v1376, %v1382
        %v1385 = vadd.f32 %v1377, %v1382
        %v1386 = vadd.f32 %v1378, %v1382
        %v1387 = vpack.c.bf16 %v1384, %v1383
        %v1388 = vpack.c.bf16 %v1386, %v1385
        %v1389 = vld [vmem:[#allocation13] sm:$0xff]
        %v1390 = vld [vmem:[#allocation13 + $0x8] sm:$0xff]
        %v1391 = vld [vmem:[#allocation13 + $0x10] sm:$0xff]
        %v1392 = vld [vmem:[#allocation13 + $0x18] sm:$0xff]
        %v1393 = vld [vmem:[#allocation13 + $0x20] sm:$0xff]
        %v1394 = vld [vmem:[#allocation13 + $0x28] sm:$0xff]
        %v1395 = vld [vmem:[#allocation13 + $0x30] sm:$0xff]
        %v1396 = vld [vmem:[#allocation13 + $0x38] sm:$0xff]
        %v1397 = vld [vmem:[#allocation13 + $0x40] sm:$0xff]
        %v1398 = vld [vmem:[#allocation13 + $0x48] sm:$0xff]
        %v1399 = vld [vmem:[#allocation13 + $0x50] sm:$0xff]
        %v1400 = vld [vmem:[#allocation13 + $0x58] sm:$0xff]
        %v1401 = vld [vmem:[#allocation13 + $0x60] sm:$0xff]
        %v1402 = vld [vmem:[#allocation13 + $0x68] sm:$0xff]
        %v1403 = vld [vmem:[#allocation13 + $0x70] sm:$0xff]
        %v1404 = vld [vmem:[#allocation13 + $0x78] sm:$0xff]
        %v1405 = vld [vmem:[#allocation13 + $0x80] sm:$0xff]
        %v1406 = vld [vmem:[#allocation13 + $0x88] sm:$0xff]
        %v1407 = vld [vmem:[#allocation13 + $0x90] sm:$0xff]
        %v1408 = vld [vmem:[#allocation13 + $0x98] sm:$0xff]
        %v1409 = vld [vmem:[#allocation13 + $0xa0] sm:$0xff]
        %v1410 = vld [vmem:[#allocation13 + $0xa8] sm:$0xff]
        %v1411 = vld [vmem:[#allocation13 + $0xb0] sm:$0xff]
        %v1412 = vld [vmem:[#allocation13 + $0xb8] sm:$0xff]
        %v1413 = vld [vmem:[#allocation13 + $0xc0] sm:$0xff]
        %v1414 = vld [vmem:[#allocation13 + $0xc8] sm:$0xff]
        %v1415 = vld [vmem:[#allocation13 + $0xd0] sm:$0xff]
        %v1416 = vld [vmem:[#allocation13 + $0xd8] sm:$0xff]
        %v1417 = vld [vmem:[#allocation13 + $0xe0] sm:$0xff]
        %v1418 = vld [vmem:[#allocation13 + $0xe8] sm:$0xff]
        %v1419 = vld [vmem:[#allocation13 + $0xf0] sm:$0xff]
        %v1420 = vld [vmem:[#allocation13 + $0xf8] sm:$0xff]
        %v1421 = vld [vmem:[%s8] sm:$0xf]
        %v1423 = vlaneseq
        %v1424 = vshrl.u32 %v1423, 7
        %v1425 = vsub.s32 0, %v1424
        %v1426 = vrot.slane %v1421, %v1425
        %v1427 = vlaneseq
        %v1428 = vshrl.u32 %v1427, 7
        %v1429 = vsub.s32 1, %v1428
        %v1430 = vrot.slane %v1421, %v1429
        %v1431 = vlaneseq
        %v1432 = vshrl.u32 %v1431, 7
        %v1433 = vsub.s32 2, %v1432
        %v1434 = vrot.slane %v1421, %v1433
        %v1435 = vlaneseq
        %v1436 = vshrl.u32 %v1435, 7
        %v1437 = vsub.s32 3, %v1436
        %v1438 = vrot.slane %v1421, %v1437
        %v1475 = vunpack.c.l.b16 %v1389
        %v1476 = vunpack.c.h.b16 %v1389
        %v1477 = vunpack.c.l.b16 %v1390
        %v1478 = vunpack.c.h.b16 %v1390
        %v1479 = vunpack.c.l.b16 %v1391
        %v1480 = vunpack.c.h.b16 %v1391
        %v1481 = vunpack.c.l.b16 %v1392
        %v1482 = vunpack.c.h.b16 %v1392
        %v1483 = vunpack.c.l.b16 %v1393
        %v1484 = vunpack.c.h.b16 %v1393
        %v1485 = vunpack.c.l.b16 %v1394
        %v1486 = vunpack.c.h.b16 %v1394
        %v1487 = vunpack.c.l.b16 %v1395
        %v1488 = vunpack.c.h.b16 %v1395
        %v1489 = vunpack.c.l.b16 %v1396
        %v1490 = vunpack.c.h.b16 %v1396
        %v1491 = vunpack.c.l.b16 %v1397
        %v1492 = vunpack.c.h.b16 %v1397
        %v1493 = vunpack.c.l.b16 %v1398
        %v1494 = vunpack.c.h.b16 %v1398
        %v1495 = vunpack.c.l.b16 %v1399
        %v1496 = vunpack.c.h.b16 %v1399
        %v1497 = vunpack.c.l.b16 %v1400
        %v1498 = vunpack.c.h.b16 %v1400
        %v1499 = vunpack.c.l.b16 %v1401
        %v1500 = vunpack.c.h.b16 %v1401
        %v1501 = vunpack.c.l.b16 %v1402
        %v1502 = vunpack.c.h.b16 %v1402
        %v1503 = vunpack.c.l.b16 %v1403
        %v1504 = vunpack.c.h.b16 %v1403
        %v1505 = vunpack.c.l.b16 %v1404
        %v1506 = vunpack.c.h.b16 %v1404
        %v1507 = vunpack.c.l.b16 %v1405
        %v1508 = vunpack.c.h.b16 %v1405
        %v1509 = vunpack.c.l.b16 %v1406
        %v1510 = vunpack.c.h.b16 %v1406
        %v1511 = vunpack.c.l.b16 %v1407
        %v1512 = vunpack.c.h.b16 %v1407
        %v1513 = vunpack.c.l.b16 %v1408
        %v1514 = vunpack.c.h.b16 %v1408
        %v1515 = vunpack.c.l.b16 %v1409
        %v1516 = vunpack.c.h.b16 %v1409
        %v1517 = vunpack.c.l.b16 %v1410
        %v1518 = vunpack.c.h.b16 %v1410
        %v1519 = vunpack.c.l.b16 %v1411
        %v1520 = vunpack.c.h.b16 %v1411
        %v1521 = vunpack.c.l.b16 %v1412
        %v1522 = vunpack.c.h.b16 %v1412
        %v1523 = vunpack.c.l.b16 %v1413
        %v1524 = vunpack.c.h.b16 %v1413
        %v1525 = vunpack.c.l.b16 %v1414
        %v1526 = vunpack.c.h.b16 %v1414
        %v1527 = vunpack.c.l.b16 %v1415
        %v1528 = vunpack.c.h.b16 %v1415
        %v1529 = vunpack.c.l.b16 %v1416
        %v1530 = vunpack.c.h.b16 %v1416
        %v1531 = vunpack.c.l.b16 %v1417
        %v1532 = vunpack.c.h.b16 %v1417
        %v1533 = vunpack.c.l.b16 %v1418
        %v1534 = vunpack.c.h.b16 %v1418
        %v1535 = vunpack.c.l.b16 %v1419
        %v1536 = vunpack.c.h.b16 %v1419
        %v1537 = vunpack.c.l.b16 %v1420
        %v1538 = vunpack.c.h.b16 %v1420
        %v1539 = vpack.c.b16 %v1479, %v1475
        %v1540 = vpack.c.b16 %v1480, %v1476
        %v1541 = vpack.c.b16 %v1481, %v1477
        %v1542 = vpack.c.b16 %v1482, %v1478
        %v1543 = vpack.c.b16 %v1487, %v1483
        %v1544 = vpack.c.b16 %v1488, %v1484
        %v1545 = vpack.c.b16 %v1489, %v1485
        %v1546 = vpack.c.b16 %v1490, %v1486
        %v1547 = vpack.c.b16 %v1495, %v1491
        %v1548 = vpack.c.b16 %v1496, %v1492
        %v1549 = vpack.c.b16 %v1497, %v1493
        %v1550 = vpack.c.b16 %v1498, %v1494
        %v1551 = vpack.c.b16 %v1503, %v1499
        %v1552 = vpack.c.b16 %v1504, %v1500
        %v1553 = vpack.c.b16 %v1505, %v1501
        %v1554 = vpack.c.b16 %v1506, %v1502
        %v1555 = vpack.c.b16 %v1511, %v1507
        %v1556 = vpack.c.b16 %v1512, %v1508
        %v1557 = vpack.c.b16 %v1513, %v1509
        %v1558 = vpack.c.b16 %v1514, %v1510
        %v1559 = vpack.c.b16 %v1519, %v1515
        %v1560 = vpack.c.b16 %v1520, %v1516
        %v1561 = vpack.c.b16 %v1521, %v1517
        %v1562 = vpack.c.b16 %v1522, %v1518
        %v1563 = vpack.c.b16 %v1527, %v1523
        %v1564 = vpack.c.b16 %v1528, %v1524
        %v1565 = vpack.c.b16 %v1529, %v1525
        %v1566 = vpack.c.b16 %v1530, %v1526
        %v1567 = vpack.c.b16 %v1535, %v1531
        %v1568 = vpack.c.b16 %v1536, %v1532
        %v1569 = vpack.c.b16 %v1537, %v1533
        %v1570 = vpack.c.b16 %v1538, %v1534
        %1603 = vmatprep.subr.bf16.mxu0 %v1568
        %1604 = vmatpush1.bf16.msra.mxu0 %v1567
        %1605 = vmatprep.subr.bf16.mxu0 %v1564
        %1606 = vmatpush1.bf16.msra.mxu0 %v1563
        %1607 = vmatprep.subr.bf16.mxu0 %v1560
        %1608 = vmatpush1.bf16.msra.mxu0 %v1559
        %1609 = vmatprep.subr.bf16.mxu0 %v1556
        %1610 = vmatpush1.bf16.msra.mxu0 %v1555
        %1611 = vmatprep.subr.bf16.mxu0 %v1552
        %1612 = vmatpush1.bf16.msra.mxu0 %v1551
        %1613 = vmatprep.subr.bf16.mxu0 %v1548
        %1614 = vmatpush1.bf16.msra.mxu0 %v1547
        %1615 = vmatprep.subr.bf16.mxu0 %v1544
        %1616 = vmatpush1.bf16.msra.mxu0 %v1543
        %1617 = vmatprep.subr.bf16.mxu0 %v1540
        %1618 = vmatpush1.bf16.msra.mxu0 %v1539
        %1619 = vmatprep.subr.bf16.mxu0 0
        %1620 = vmatpush2.bf16.msra.mxu0 0
        %1621 = vmatprep.subr.bf16.mxu0 0
        %1622 = vmatpush2.bf16.msra.mxu0 0
        %1623 = vmatprep.subr.bf16.mxu0 0
        %1624 = vmatpush2.bf16.msra.mxu0 0
        %1625 = vmatprep.subr.bf16.mxu0 0
        %1626 = vmatpush2.bf16.msra.mxu0 0
        %1627 = vmatprep.subr.bf16.mxu0 0
        %1628 = vmatpush2.bf16.msra.mxu0 0
        %1629 = vmatprep.subr.bf16.mxu0 0
        %1630 = vmatpush2.bf16.msra.mxu0 0
        %1631 = vmatprep.subr.bf16.mxu0 0
        %1632 = vmatpush2.bf16.msra.mxu0 0
        %1633 = vmatprep.subr.bf16.mxu0 0
        %1634 = vmatpush2.bf16.msra.mxu0 0
        %1635 = vmatprep.mubr.bf16.mxu0 0
        %1636 = vmatmul.mubr.bf16.gmra.mxu0 %v1387
        %v1637 = vpop.f32.mrf.mxu0
        %v1638 = vadd.f32 %v1426, %v1637
        %v1639 = vpop.f32.mrf.mxu0
        %v1640 = vadd.f32 %v1430, %v1639
        %v1641 = vpop.f32.mrf.mxu0
        %v1642 = vadd.f32 %v1426, %v1641
        %v1643 = vpop.f32.mrf.mxu0
        %v1644 = vadd.f32 %v1430, %v1643
        %1645 = vmatprep.mubr.bf16.mxu0 0
        %1646 = vmatmul.mubr.bf16.gmra.mxu0 %v1388
        %v1647 = vpop.f32.mrf.mxu0
        %v1648 = vadd.f32 %v1426, %v1647
        %v1649 = vpop.f32.mrf.mxu0
        %v1650 = vadd.f32 %v1430, %v1649
        %v1651 = vpop.f32.mrf.mxu0
        %v1652 = vadd.f32 %v1426, %v1651
        %v1653 = vpop.f32.mrf.mxu0
        %v1654 = vadd.f32 %v1430, %v1653
        %1655 = vdwg.mxu0
        %1656 = vmatprep.subr.bf16.mxu0 %v1570
        %1657 = vmatpush1.bf16.msra.mxu0 %v1569
        %1658 = vmatprep.subr.bf16.mxu0 %v1566
        %1659 = vmatpush1.bf16.msra.mxu0 %v1565
        %1660 = vmatprep.subr.bf16.mxu0 %v1562
        %1661 = vmatpush1.bf16.msra.mxu0 %v1561
        %1662 = vmatprep.subr.bf16.mxu0 %v1558
        %1663 = vmatpush1.bf16.msra.mxu0 %v1557
        %1664 = vmatprep.subr.bf16.mxu0 %v1554
        %1665 = vmatpush1.bf16.msra.mxu0 %v1553
        %1666 = vmatprep.subr.bf16.mxu0 %v1550
        %1667 = vmatpush1.bf16.msra.mxu0 %v1549
        %1668 = vmatprep.subr.bf16.mxu0 %v1546
        %1669 = vmatpush1.bf16.msra.mxu0 %v1545
        %1670 = vmatprep.subr.bf16.mxu0 %v1542
        %1671 = vmatpush1.bf16.msra.mxu0 %v1541
        %1672 = vmatprep.subr.bf16.mxu0 0
        %1673 = vmatpush2.bf16.msra.mxu0 0
        %1674 = vmatprep.subr.bf16.mxu0 0
        %1675 = vmatpush2.bf16.msra.mxu0 0
        %1676 = vmatprep.subr.bf16.mxu0 0
        %1677 = vmatpush2.bf16.msra.mxu0 0
        %1678 = vmatprep.subr.bf16.mxu0 0
        %1679 = vmatpush2.bf16.msra.mxu0 0
        %1680 = vmatprep.subr.bf16.mxu0 0
        %1681 = vmatpush2.bf16.msra.mxu0 0
        %1682 = vmatprep.subr.bf16.mxu0 0
        %1683 = vmatpush2.bf16.msra.mxu0 0
        %1684 = vmatprep.subr.bf16.mxu0 0
        %1685 = vmatpush2.bf16.msra.mxu0 0
        %1686 = vmatprep.subr.bf16.mxu0 0
        %1687 = vmatpush2.bf16.msra.mxu0 0
        %1688 = vmatprep.mubr.bf16.mxu0 0
        %1689 = vmatmul.mubr.bf16.gmra.mxu0 %v1387
        %v1690 = vpop.f32.mrf.mxu0
        %v1691 = vadd.f32 %v1434, %v1690
        %v1692 = vpop.f32.mrf.mxu0
        %v1693 = vadd.f32 %v1438, %v1692
        %v1694 = vpop.f32.mrf.mxu0
        %v1695 = vadd.f32 %v1434, %v1694
        %v1696 = vpop.f32.mrf.mxu0
        %v1697 = vadd.f32 %v1438, %v1696
        %1698 = vmatprep.mubr.bf16.mxu0 0
        %1699 = vmatmul.mubr.bf16.gmra.mxu0 %v1388
        %v1700 = vpop.f32.mrf.mxu0
        %v1701 = vadd.f32 %v1434, %v1700
        %v1702 = vpop.f32.mrf.mxu0
        %v1703 = vadd.f32 %v1438, %v1702
        %v1704 = vpop.f32.mrf.mxu0
        %v1705 = vadd.f32 %v1434, %v1704
        %v1706 = vpop.f32.mrf.mxu0
        %v1707 = vadd.f32 %v1438, %v1706
        %1708 = vdwg.mxu0
        %v1709 = vmul.f32 %v1638, 0.5
        %v1710 = vmul.f32 %v1640, 0.5
        %v1711 = vmul.f32 %v1691, 0.5
        %v1712 = vmul.f32 %v1693, 0.5
        %v1713 = vmul.f32 %v1642, 0.5
        %v1714 = vmul.f32 %v1644, 0.5
        %v1715 = vmul.f32 %v1695, 0.5
        %v1716 = vmul.f32 %v1697, 0.5
        %v1717 = vmul.f32 %v1648, 0.5
        %v1718 = vmul.f32 %v1650, 0.5
        %v1719 = vmul.f32 %v1701, 0.5
        %v1720 = vmul.f32 %v1703, 0.5
        %v1721 = vmul.f32 %v1652, 0.5
        %v1722 = vmul.f32 %v1654, 0.5
        %v1723 = vmul.f32 %v1705, 0.5
        %v1724 = vmul.f32 %v1707, 0.5
        %v1725 = vmul.f32 %v1638, 0.044715
        %v1726 = vmul.f32 %v1640, 0.044715
        %v1727 = vmul.f32 %v1691, 0.044715
        %v1728 = vmul.f32 %v1693, 0.044715
        %v1729 = vmul.f32 %v1642, 0.044715
        %v1730 = vmul.f32 %v1644, 0.044715
        %v1731 = vmul.f32 %v1695, 0.044715
        %v1732 = vmul.f32 %v1697, 0.044715
        %v1733 = vmul.f32 %v1648, 0.044715
        %v1734 = vmul.f32 %v1650, 0.044715
        %v1735 = vmul.f32 %v1701, 0.044715
        %v1736 = vmul.f32 %v1703, 0.044715
        %v1737 = vmul.f32 %v1652, 0.044715
        %v1738 = vmul.f32 %v1654, 0.044715
        %v1739 = vmul.f32 %v1705, 0.044715
        %v1740 = vmul.f32 %v1707, 0.044715
        %v1741 = vmul.f32 %v1725, %v1638
        %v1742 = vmul.f32 %v1726, %v1640
        %v1743 = vmul.f32 %v1727, %v1691
        %v1744 = vmul.f32 %v1728, %v1693
        %v1745 = vmul.f32 %v1729, %v1642
        %v1746 = vmul.f32 %v1730, %v1644
        %v1747 = vmul.f32 %v1731, %v1695
        %v1748 = vmul.f32 %v1732, %v1697
        %v1749 = vmul.f32 %v1733, %v1648
        %v1750 = vmul.f32 %v1734, %v1650
        %v1751 = vmul.f32 %v1735, %v1701
        %v1752 = vmul.f32 %v1736, %v1703
        %v1753 = vmul.f32 %v1737, %v1652
        %v1754 = vmul.f32 %v1738, %v1654
        %v1755 = vmul.f32 %v1739, %v1705
        %v1756 = vmul.f32 %v1740, %v1707
        %v1757 = vmul.f32 %v1741, %v1638
        %v1758 = vmul.f32 %v1742, %v1640
        %v1759 = vmul.f32 %v1743, %v1691
        %v1760 = vmul.f32 %v1744, %v1693
        %v1761 = vmul.f32 %v1745, %v1642
        %v1762 = vmul.f32 %v1746, %v1644
        %v1763 = vmul.f32 %v1747, %v1695
        %v1764 = vmul.f32 %v1748, %v1697
        %v1765 = vmul.f32 %v1749, %v1648
        %v1766 = vmul.f32 %v1750, %v1650
        %v1767 = vmul.f32 %v1751, %v1701
        %v1768 = vmul.f32 %v1752, %v1703
        %v1769 = vmul.f32 %v1753, %v1652
        %v1770 = vmul.f32 %v1754, %v1654
        %v1771 = vmul.f32 %v1755, %v1705
        %v1772 = vmul.f32 %v1756, %v1707
        %v1773 = vadd.f32 %v1638, %v1757
        %v1774 = vadd.f32 %v1640, %v1758
        %v1775 = vadd.f32 %v1691, %v1759
        %v1776 = vadd.f32 %v1693, %v1760
        %v1777 = vadd.f32 %v1642, %v1761
        %v1778 = vadd.f32 %v1644, %v1762
        %v1779 = vadd.f32 %v1695, %v1763
        %v1780 = vadd.f32 %v1697, %v1764
        %v1781 = vadd.f32 %v1648, %v1765
        %v1782 = vadd.f32 %v1650, %v1766
        %v1783 = vadd.f32 %v1701, %v1767
        %v1784 = vadd.f32 %v1703, %v1768
        %v1785 = vadd.f32 %v1652, %v1769
        %v1786 = vadd.f32 %v1654, %v1770
        %v1787 = vadd.f32 %v1705, %v1771
        %v1788 = vadd.f32 %v1707, %v1772
        %v1789 = vmul.f32 %v1773, 0.7978846
        %v1790 = vmul.f32 %v1774, 0.7978846
        %v1791 = vmul.f32 %v1775, 0.7978846
        %v1792 = vmul.f32 %v1776, 0.7978846
        %v1793 = vmul.f32 %v1777, 0.7978846
        %v1794 = vmul.f32 %v1778, 0.7978846
        %v1795 = vmul.f32 %v1779, 0.7978846
        %v1796 = vmul.f32 %v1780, 0.7978846
        %v1797 = vmul.f32 %v1781, 0.7978846
        %v1798 = vmul.f32 %v1782, 0.7978846
        %v1799 = vmul.f32 %v1783, 0.7978846
        %v1800 = vmul.f32 %v1784, 0.7978846
        %v1801 = vmul.f32 %v1785, 0.7978846
        %v1802 = vmul.f32 %v1786, 0.7978846
        %v1803 = vmul.f32 %v1787, 0.7978846
        %v1804 = vmul.f32 %v1788, 0.7978846
        %v1805 = vtanh.pop %v1789
        %v1806 = vtanh.pop %v1790
        %v1807 = vtanh.pop %v1791
        %v1808 = vtanh.pop %v1792
        %v1809 = vtanh.pop %v1793
        %v1810 = vtanh.pop %v1794
        %v1811 = vtanh.pop %v1795
        %v1812 = vtanh.pop %v1796
        %v1813 = vtanh.pop %v1797
        %v1814 = vtanh.pop %v1798
        %v1815 = vtanh.pop %v1799
        %v1816 = vtanh.pop %v1800
        %v1817 = vtanh.pop %v1801
        %v1818 = vtanh.pop %v1802
        %v1819 = vtanh.pop %v1803
        %v1820 = vtanh.pop %v1804
        %v1821 = vadd.f32 %v1805, 1.0
        %v1822 = vadd.f32 %v1806, 1.0
        %v1823 = vadd.f32 %v1807, 1.0
        %v1824 = vadd.f32 %v1808, 1.0
        %v1825 = vadd.f32 %v1809, 1.0
        %v1826 = vadd.f32 %v1810, 1.0
        %v1827 = vadd.f32 %v1811, 1.0
        %v1828 = vadd.f32 %v1812, 1.0
        %v1829 = vadd.f32 %v1813, 1.0
        %v1830 = vadd.f32 %v1814, 1.0
        %v1831 = vadd.f32 %v1815, 1.0
        %v1832 = vadd.f32 %v1816, 1.0
        %v1833 = vadd.f32 %v1817, 1.0
        %v1834 = vadd.f32 %v1818, 1.0
        %v1835 = vadd.f32 %v1819, 1.0
        %v1836 = vadd.f32 %v1820, 1.0
        %v1837 = vmul.f32 %v1709, %v1821
        %v1838 = vmul.f32 %v1710, %v1822
        %v1839 = vmul.f32 %v1711, %v1823
        %v1840 = vmul.f32 %v1712, %v1824
        %v1841 = vmul.f32 %v1713, %v1825
        %v1842 = vmul.f32 %v1714, %v1826
        %v1843 = vmul.f32 %v1715, %v1827
        %v1844 = vmul.f32 %v1716, %v1828
        %v1845 = vmul.f32 %v1717, %v1829
        %v1846 = vmul.f32 %v1718, %v1830
        %v1847 = vmul.f32 %v1719, %v1831
        %v1848 = vmul.f32 %v1720, %v1832
        %v1849 = vmul.f32 %v1721, %v1833
        %v1850 = vmul.f32 %v1722, %v1834
        %v1851 = vmul.f32 %v1723, %v1835
        %v1852 = vmul.f32 %v1724, %v1836
        %v1853 = vpack.c.bf16 %v1841, %v1837
        %v1854 = vpack.c.bf16 %v1842, %v1838
        %v1855 = vpack.c.bf16 %v1843, %v1839
        %v1856 = vpack.c.bf16 %v1844, %v1840
        %v1857 = vpack.c.bf16 %v1849, %v1845
        %v1858 = vpack.c.bf16 %v1850, %v1846
        %v1859 = vpack.c.bf16 %v1851, %v1847
        %v1860 = vpack.c.bf16 %v1852, %v1848
        %v1861 = vld [vmem:[#allocation14] sm:$0xf]
        %v1862 = vld [vmem:[#allocation14 + $0x4] sm:$0xf]
        %v1863 = vld [vmem:[#allocation14 + $0x8] sm:$0xf]
        %v1864 = vld [vmem:[#allocation14 + $0xc] sm:$0xf]
        %v1865 = vld [vmem:[#allocation14 + $0x10] sm:$0xf]
        %v1866 = vld [vmem:[#allocation14 + $0x14] sm:$0xf]
        %v1867 = vld [vmem:[#allocation14 + $0x18] sm:$0xf]
        %v1868 = vld [vmem:[#allocation14 + $0x1c] sm:$0xf]
        %v1869 = vld [vmem:[#allocation14 + $0x20] sm:$0xf]
        %v1870 = vld [vmem:[#allocation14 + $0x24] sm:$0xf]
        %v1871 = vld [vmem:[#allocation14 + $0x28] sm:$0xf]
        %v1872 = vld [vmem:[#allocation14 + $0x2c] sm:$0xf]
        %v1873 = vld [vmem:[#allocation14 + $0x30] sm:$0xf]
        %v1874 = vld [vmem:[#allocation14 + $0x34] sm:$0xf]
        %v1875 = vld [vmem:[#allocation14 + $0x38] sm:$0xf]
        %v1876 = vld [vmem:[#allocation14 + $0x3c] sm:$0xf]
        %v1877 = vld [vmem:[#allocation14 + $0x40] sm:$0xf]
        %v1878 = vld [vmem:[#allocation14 + $0x44] sm:$0xf]
        %v1879 = vld [vmem:[#allocation14 + $0x48] sm:$0xf]
        %v1880 = vld [vmem:[#allocation14 + $0x4c] sm:$0xf]
        %v1881 = vld [vmem:[#allocation14 + $0x50] sm:$0xf]
        %v1882 = vld [vmem:[#allocation14 + $0x54] sm:$0xf]
        %v1883 = vld [vmem:[#allocation14 + $0x58] sm:$0xf]
        %v1884 = vld [vmem:[#allocation14 + $0x5c] sm:$0xf]
        %v1885 = vld [vmem:[#allocation14 + $0x60] sm:$0xf]
        %v1886 = vld [vmem:[#allocation14 + $0x64] sm:$0xf]
        %v1887 = vld [vmem:[#allocation14 + $0x68] sm:$0xf]
        %v1888 = vld [vmem:[#allocation14 + $0x6c] sm:$0xf]
        %v1889 = vld [vmem:[#allocation14 + $0x70] sm:$0xf]
        %v1890 = vld [vmem:[#allocation14 + $0x74] sm:$0xf]
        %v1891 = vld [vmem:[#allocation14 + $0x78] sm:$0xf]
        %v1892 = vld [vmem:[#allocation14 + $0x7c] sm:$0xf]
        %v1893 = vld [vmem:[#allocation14 + $0x80] sm:$0xf]
        %v1894 = vld [vmem:[#allocation14 + $0x84] sm:$0xf]
        %v1895 = vld [vmem:[#allocation14 + $0x88] sm:$0xf]
        %v1896 = vld [vmem:[#allocation14 + $0x8c] sm:$0xf]
        %v1897 = vld [vmem:[#allocation14 + $0x90] sm:$0xf]
        %v1898 = vld [vmem:[#allocation14 + $0x94] sm:$0xf]
        %v1899 = vld [vmem:[#allocation14 + $0x98] sm:$0xf]
        %v1900 = vld [vmem:[#allocation14 + $0x9c] sm:$0xf]
        %v1901 = vld [vmem:[#allocation14 + $0xa0] sm:$0xf]
        %v1902 = vld [vmem:[#allocation14 + $0xa4] sm:$0xf]
        %v1903 = vld [vmem:[#allocation14 + $0xa8] sm:$0xf]
        %v1904 = vld [vmem:[#allocation14 + $0xac] sm:$0xf]
        %v1905 = vld [vmem:[#allocation14 + $0xb0] sm:$0xf]
        %v1906 = vld [vmem:[#allocation14 + $0xb4] sm:$0xf]
        %v1907 = vld [vmem:[#allocation14 + $0xb8] sm:$0xf]
        %v1908 = vld [vmem:[#allocation14 + $0xbc] sm:$0xf]
        %v1909 = vld [vmem:[#allocation14 + $0xc0] sm:$0xf]
        %v1910 = vld [vmem:[#allocation14 + $0xc4] sm:$0xf]
        %v1911 = vld [vmem:[#allocation14 + $0xc8] sm:$0xf]
        %v1912 = vld [vmem:[#allocation14 + $0xcc] sm:$0xf]
        %v1913 = vld [vmem:[#allocation14 + $0xd0] sm:$0xf]
        %v1914 = vld [vmem:[#allocation14 + $0xd4] sm:$0xf]
        %v1915 = vld [vmem:[#allocation14 + $0xd8] sm:$0xf]
        %v1916 = vld [vmem:[#allocation14 + $0xdc] sm:$0xf]
        %v1917 = vld [vmem:[#allocation14 + $0xe0] sm:$0xf]
        %v1918 = vld [vmem:[#allocation14 + $0xe4] sm:$0xf]
        %v1919 = vld [vmem:[#allocation14 + $0xe8] sm:$0xf]
        %v1920 = vld [vmem:[#allocation14 + $0xec] sm:$0xf]
        %v1921 = vld [vmem:[#allocation14 + $0xf0] sm:$0xf]
        %v1922 = vld [vmem:[#allocation14 + $0xf4] sm:$0xf]
        %v1923 = vld [vmem:[#allocation14 + $0xf8] sm:$0xf]
        %v1924 = vld [vmem:[#allocation14 + $0xfc] sm:$0xf]
        %v1925 = vld [vmem:[%s10] sm:$0x1]
        %v1927 = vlaneseq
        %v1928 = vshrl.u32 %v1927, 7
        %v1929 = vsub.s32 0, %v1928
        %v1930 = vrot.slane %v1925, %v1929
        %v1996 = vunpack.c.l.b16 %v1861
        %v1997 = vunpack.c.l.b16 %v1862
        %v1998 = vunpack.c.l.b16 %v1863
        %v1999 = vunpack.c.l.b16 %v1864
        %v2000 = vunpack.c.l.b16 %v1865
        %v2001 = vunpack.c.l.b16 %v1866
        %v2002 = vunpack.c.l.b16 %v1867
        %v2003 = vunpack.c.l.b16 %v1868
        %v2004 = vunpack.c.l.b16 %v1869
        %v2005 = vunpack.c.l.b16 %v1870
        %v2006 = vunpack.c.l.b16 %v1871
        %v2007 = vunpack.c.l.b16 %v1872
        %v2008 = vunpack.c.l.b16 %v1873
        %v2009 = vunpack.c.l.b16 %v1874
        %v2010 = vunpack.c.l.b16 %v1875
        %v2011 = vunpack.c.l.b16 %v1876
        %v2012 = vunpack.c.l.b16 %v1877
        %v2013 = vunpack.c.l.b16 %v1878
        %v2014 = vunpack.c.l.b16 %v1879
        %v2015 = vunpack.c.l.b16 %v1880
        %v2016 = vunpack.c.l.b16 %v1881
        %v2017 = vunpack.c.l.b16 %v1882
        %v2018 = vunpack.c.l.b16 %v1883
        %v2019 = vunpack.c.l.b16 %v1884
        %v2020 = vunpack.c.l.b16 %v1885
        %v2021 = vunpack.c.l.b16 %v1886
        %v2022 = vunpack.c.l.b16 %v1887
        %v2023 = vunpack.c.l.b16 %v1888
        %v2024 = vunpack.c.l.b16 %v1889
        %v2025 = vunpack.c.l.b16 %v1890
        %v2026 = vunpack.c.l.b16 %v1891
        %v2027 = vunpack.c.l.b16 %v1892
        %v2028 = vunpack.c.l.b16 %v1893
        %v2029 = vunpack.c.l.b16 %v1894
        %v2030 = vunpack.c.l.b16 %v1895
        %v2031 = vunpack.c.l.b16 %v1896
        %v2032 = vunpack.c.l.b16 %v1897
        %v2033 = vunpack.c.l.b16 %v1898
        %v2034 = vunpack.c.l.b16 %v1899
        %v2035 = vunpack.c.l.b16 %v1900
        %v2036 = vunpack.c.l.b16 %v1901
        %v2037 = vunpack.c.l.b16 %v1902
        %v2038 = vunpack.c.l.b16 %v1903
        %v2039 = vunpack.c.l.b16 %v1904
        %v2040 = vunpack.c.l.b16 %v1905
        %v2041 = vunpack.c.l.b16 %v1906
        %v2042 = vunpack.c.l.b16 %v1907
        %v2043 = vunpack.c.l.b16 %v1908
        %v2044 = vunpack.c.l.b16 %v1909
        %v2045 = vunpack.c.l.b16 %v1910
        %v2046 = vunpack.c.l.b16 %v1911
        %v2047 = vunpack.c.l.b16 %v1912
        %v2048 = vunpack.c.l.b16 %v1913
        %v2049 = vunpack.c.l.b16 %v1914
        %v2050 = vunpack.c.l.b16 %v1915
        %v2051 = vunpack.c.l.b16 %v1916
        %v2052 = vunpack.c.l.b16 %v1917
        %v2053 = vunpack.c.l.b16 %v1918
        %v2054 = vunpack.c.l.b16 %v1919
        %v2055 = vunpack.c.l.b16 %v1920
        %v2056 = vunpack.c.l.b16 %v1921
        %v2057 = vunpack.c.l.b16 %v1922
        %v2058 = vunpack.c.l.b16 %v1923
        %v2059 = vunpack.c.l.b16 %v1924
        %v2060 = vpack.c.b16 %v1997, %v1996
        %v2061 = vpack.c.b16 %v1999, %v1998
        %v2062 = vpack.c.b16 %v2001, %v2000
        %v2063 = vpack.c.b16 %v2003, %v2002
        %v2064 = vpack.c.b16 %v2005, %v2004
        %v2065 = vpack.c.b16 %v2007, %v2006
        %v2066 = vpack.c.b16 %v2009, %v2008
        %v2067 = vpack.c.b16 %v2011, %v2010
        %v2068 = vpack.c.b16 %v2013, %v2012
        %v2069 = vpack.c.b16 %v2015, %v2014
        %v2070 = vpack.c.b16 %v2017, %v2016
        %v2071 = vpack.c.b16 %v2019, %v2018
        %v2072 = vpack.c.b16 %v2021, %v2020
        %v2073 = vpack.c.b16 %v2023, %v2022
        %v2074 = vpack.c.b16 %v2025, %v2024
        %v2075 = vpack.c.b16 %v2027, %v2026
        %v2076 = vpack.c.b16 %v2029, %v2028
        %v2077 = vpack.c.b16 %v2031, %v2030
        %v2078 = vpack.c.b16 %v2033, %v2032
        %v2079 = vpack.c.b16 %v2035, %v2034
        %v2080 = vpack.c.b16 %v2037, %v2036
        %v2081 = vpack.c.b16 %v2039, %v2038
        %v2082 = vpack.c.b16 %v2041, %v2040
        %v2083 = vpack.c.b16 %v2043, %v2042
        %v2084 = vpack.c.b16 %v2045, %v2044
        %v2085 = vpack.c.b16 %v2047, %v2046
        %v2086 = vpack.c.b16 %v2049, %v2048
        %v2087 = vpack.c.b16 %v2051, %v2050
        %v2088 = vpack.c.b16 %v2053, %v2052
        %v2089 = vpack.c.b16 %v2055, %v2054
        %v2090 = vpack.c.b16 %v2057, %v2056
        %v2091 = vpack.c.b16 %v2059, %v2058
        %2124 = vmatprep.subr.bf16.mxu0 0
        %2125 = vmatpush1.bf16.msra.mxu0 %v2067
        %2126 = vmatprep.subr.bf16.mxu0 0
        %2127 = vmatpush1.bf16.msra.mxu0 %v2066
        %2128 = vmatprep.subr.bf16.mxu0 0
        %2129 = vmatpush1.bf16.msra.mxu0 %v2065
        %2130 = vmatprep.subr.bf16.mxu0 0
        %2131 = vmatpush1.bf16.msra.mxu0 %v2064
        %2132 = vmatprep.subr.bf16.mxu0 0
        %2133 = vmatpush1.bf16.msra.mxu0 %v2063
        %2134 = vmatprep.subr.bf16.mxu0 0
        %2135 = vmatpush1.bf16.msra.mxu0 %v2062
        %2136 = vmatprep.subr.bf16.mxu0 0
        %2137 = vmatpush1.bf16.msra.mxu0 %v2061
        %2138 = vmatprep.subr.bf16.mxu0 0
        %2139 = vmatpush1.bf16.msra.mxu0 %v2060
        %2140 = vmatprep.subr.bf16.mxu0 0
        %2141 = vmatpush2.bf16.msra.mxu0 %v2075
        %2142 = vmatprep.subr.bf16.mxu0 0
        %2143 = vmatpush2.bf16.msra.mxu0 %v2074
        %2144 = vmatprep.subr.bf16.mxu0 0
        %2145 = vmatpush2.bf16.msra.mxu0 %v2073
        %2146 = vmatprep.subr.bf16.mxu0 0
        %2147 = vmatpush2.bf16.msra.mxu0 %v2072
        %2148 = vmatprep.subr.bf16.mxu0 0
        %2149 = vmatpush2.bf16.msra.mxu0 %v2071
        %2150 = vmatprep.subr.bf16.mxu0 0
        %2151 = vmatpush2.bf16.msra.mxu0 %v2070
        %2152 = vmatprep.subr.bf16.mxu0 0
        %2153 = vmatpush2.bf16.msra.mxu0 %v2069
        %2154 = vmatprep.subr.bf16.mxu0 0
        %2155 = vmatpush2.bf16.msra.mxu0 %v2068
        %2156 = vmatprep.mubr.bf16.mxu0 %v1854
        %2157 = vmatmul.mubr.bf16.gmra.mxu0 %v1853
        %v2158 = vpop.f32.mrf.mxu0
        %v2159 = vadd.f32 %v1930, %v2158
        %v2160 = vpop.f32.mrf.mxu0
        %v2161 = vpop.f32.mrf.mxu0
        %v2162 = vadd.f32 %v1930, %v2161
        %v2163 = vpop.f32.mrf.mxu0
        %2164 = vmatprep.mubr.bf16.mxu0 %v1858
        %2165 = vmatmul.mubr.bf16.gmra.mxu0 %v1857
        %v2166 = vpop.f32.mrf.mxu0
        %v2167 = vadd.f32 %v1930, %v2166
        %v2168 = vpop.f32.mrf.mxu0
        %v2169 = vpop.f32.mrf.mxu0
        %v2170 = vadd.f32 %v1930, %v2169
        %v2171 = vpop.f32.mrf.mxu0
        %2172 = vdwg.mxu0
        %2173 = vmatprep.subr.bf16.mxu0 0
        %2174 = vmatpush1.bf16.msra.mxu0 %v2083
        %2175 = vmatprep.subr.bf16.mxu0 0
        %2176 = vmatpush1.bf16.msra.mxu0 %v2082
        %2177 = vmatprep.subr.bf16.mxu0 0
        %2178 = vmatpush1.bf16.msra.mxu0 %v2081
        %2179 = vmatprep.subr.bf16.mxu0 0
        %2180 = vmatpush1.bf16.msra.mxu0 %v2080
        %2181 = vmatprep.subr.bf16.mxu0 0
        %2182 = vmatpush1.bf16.msra.mxu0 %v2079
        %2183 = vmatprep.subr.bf16.mxu0 0
        %2184 = vmatpush1.bf16.msra.mxu0 %v2078
        %2185 = vmatprep.subr.bf16.mxu0 0
        %2186 = vmatpush1.bf16.msra.mxu0 %v2077
        %2187 = vmatprep.subr.bf16.mxu0 0
        %2188 = vmatpush1.bf16.msra.mxu0 %v2076
        %2189 = vmatprep.subr.bf16.mxu0 0
        %2190 = vmatpush2.bf16.msra.mxu0 %v2091
        %2191 = vmatprep.subr.bf16.mxu0 0
        %2192 = vmatpush2.bf16.msra.mxu0 %v2090
        %2193 = vmatprep.subr.bf16.mxu0 0
        %2194 = vmatpush2.bf16.msra.mxu0 %v2089
        %2195 = vmatprep.subr.bf16.mxu0 0
        %2196 = vmatpush2.bf16.msra.mxu0 %v2088
        %2197 = vmatprep.subr.bf16.mxu0 0
        %2198 = vmatpush2.bf16.msra.mxu0 %v2087
        %2199 = vmatprep.subr.bf16.mxu0 0
        %2200 = vmatpush2.bf16.msra.mxu0 %v2086
        %2201 = vmatprep.subr.bf16.mxu0 0
        %2202 = vmatpush2.bf16.msra.mxu0 %v2085
        %2203 = vmatprep.subr.bf16.mxu0 0
        %2204 = vmatpush2.bf16.msra.mxu0 %v2084
        %2205 = vmatprep.mubr.bf16.mxu0 %v1856
        %2206 = vmatmul.mubr.bf16.gmra.mxu0 %v1855
        %v2207 = vpop.f32.mrf.mxu0
        %v2208 = vadd.f32 %v2159, %v2207
        %v2209 = vpop.f32.mrf.mxu0
        %v2210 = vpop.f32.mrf.mxu0
        %v2211 = vadd.f32 %v2162, %v2210
        %v2212 = vpop.f32.mrf.mxu0
        %2213 = vmatprep.mubr.bf16.mxu0 %v1860
        %2214 = vmatmul.mubr.bf16.gmra.mxu0 %v1859
        %v2215 = vpop.f32.mrf.mxu0
        %v2216 = vadd.f32 %v2167, %v2215
        %v2217 = vpop.f32.mrf.mxu0
        %v2218 = vpop.f32.mrf.mxu0
        %v2219 = vadd.f32 %v2170, %v2218
        %v2220 = vpop.f32.mrf.mxu0
        %2221 = vdwg.mxu0
        %v2222 = vadd.f32 %v1383, %v2208
        %v2223 = vadd.f32 %v1384, %v2211
        %v2224 = vadd.f32 %v1385, %v2216
        %v2225 = vadd.f32 %v1386, %v2219
        %2226 = vadd.xlane.f32.xlu0 %v2222
        %v2227 = vpop.xlane.xlu0 %2226
        %2228 = vadd.xlane.f32.xlu0 %v2223
        %v2229 = vpop.xlane.xlu0 %2228
        %2230 = vadd.xlane.f32.xlu0 %v2224
        %v2231 = vpop.xlane.xlu0 %2230
        %2232 = vadd.xlane.f32.xlu0 %v2225
        %v2233 = vpop.xlane.xlu0 %2232
        %v2234 = vmul.f32 %v2227, %v1334
        %v2235 = vmul.f32 %v2229, %v1334
        %v2236 = vmul.f32 %v2231, %v1334
        %v2237 = vmul.f32 %v2233, %v1334
        %v2238 = vsub.f32 %v2222, %v2234
        %v2239 = vsub.f32 %v2223, %v2235
        %v2240 = vsub.f32 %v2224, %v2236
        %v2241 = vsub.f32 %v2225, %v2237
        %v2242 = vmul.f32 %v2238, %v2238
        %v2243 = vmul.f32 %v2239, %v2239
        %v2244 = vmul.f32 %v2240, %v2240
        %v2245 = vmul.f32 %v2241, %v2241
        %2246 = vadd.xlane.f32.xlu0 %v2242
        %v2247 = vpop.xlane.xlu0 %2246
        %2248 = vadd.xlane.f32.xlu0 %v2243
        %v2249 = vpop.xlane.xlu0 %2248
        %2250 = vadd.xlane.f32.xlu0 %v2244
        %v2251 = vpop.xlane.xlu0 %2250
        %2252 = vadd.xlane.f32.xlu0 %v2245
        %v2253 = vpop.xlane.xlu0 %2252
        %v2254 = vmul.f32 %v2247, %v1334
        %v2255 = vmul.f32 %v2249, %v1334
        %v2256 = vmul.f32 %v2251, %v1334
        %v2257 = vmul.f32 %v2253, %v1334
        %v2258 = vadd.f32 %v2254, 1e-12
        %v2259 = vadd.f32 %v2255, 1e-12
        %v2260 = vadd.f32 %v2256, 1e-12
        %v2261 = vadd.f32 %v2257, 1e-12
        %v2262 = vrsqrt.pop %v2258
        %v2263 = vrsqrt.pop %v2259
        %v2264 = vrsqrt.pop %v2260
        %v2265 = vrsqrt.pop %v2261
        %v2266 = vmul.f32 %v2238, %v2262
        %v2267 = vmul.f32 %v2239, %v2263
        %v2268 = vmul.f32 %v2240, %v2264
        %v2269 = vmul.f32 %v2241, %v2265
        %v2270 = vlaneseq
        %v2271 = vshrl.u32 %v2270, 7
        %v2272 = vsub.s32 0, %v2271
        %v2273 = vrot.slane %v1321, %v2272
        %v2274 = vmul.f32 %v2266, %v2273
        %v2275 = vmul.f32 %v2267, %v2273
        %v2276 = vmul.f32 %v2268, %v2273
        %v2277 = vmul.f32 %v2269, %v2273
        %v2278 = vlaneseq
        %v2279 = vshrl.u32 %v2278, 7
        %v2280 = vsub.s32 1, %v2279
        %v2281 = vrot.slane %v1321, %v2280
        %v2282 = vadd.f32 %v2274, %v2281
        %v2283 = vadd.f32 %v2275, %v2281
        %v2284 = vadd.f32 %v2276, %v2281
        %v2285 = vadd.f32 %v2277, %v2281
        %v2286 = vpack.c.bf16 %v2283, %v2282
        %v2287 = vpack.c.bf16 %v2285, %v2284
        %v2288 = vld [vmem:[%s570] sm:$0xff]
        %v2289 = vld [vmem:[%s570 + $0x8] sm:$0xff]
        %v2290 = vpack.c.bf16 %v2288, %v2288
        %v2291 = vpack.c.bf16 %v2289, %v2289
        %v2293 = vsel %vm1061, %v2290, 0
        %2295 = vmatprep.subr.bf16.mxu0 0
        %2296 = vmatpush1.bf16.msra.mxu0 0
        %2297 = vmatprep.subr.bf16.mxu0 0
        %2298 = vmatpush1.bf16.msra.mxu0 0
        %2299 = vmatprep.subr.bf16.mxu0 0
        %2300 = vmatpush1.bf16.msra.mxu0 0
        %2301 = vmatprep.subr.bf16.mxu0 0
        %2302 = vmatpush1.bf16.msra.mxu0 0
        %2303 = vmatprep.subr.bf16.mxu0 0
        %2304 = vmatpush1.bf16.msra.mxu0 0
        %2305 = vmatprep.subr.bf16.mxu0 0
        %2306 = vmatpush1.bf16.msra.mxu0 0
        %2307 = vmatprep.subr.bf16.mxu0 0
        %2308 = vmatpush1.bf16.msra.mxu0 0
        %2309 = vmatprep.subr.bf16.mxu0 0
        %2310 = vmatpush1.bf16.msra.mxu0 %v2286
        %2311 = vmatprep.subr.bf16.mxu0 0
        %2312 = vmatpush2.bf16.msra.mxu0 0
        %2313 = vmatprep.subr.bf16.mxu0 0
        %2314 = vmatpush2.bf16.msra.mxu0 0
        %2315 = vmatprep.subr.bf16.mxu0 0
        %2316 = vmatpush2.bf16.msra.mxu0 0
        %2317 = vmatprep.subr.bf16.mxu0 0
        %2318 = vmatpush2.bf16.msra.mxu0 0
        %2319 = vmatprep.subr.bf16.mxu0 0
        %2320 = vmatpush2.bf16.msra.mxu0 0
        %2321 = vmatprep.subr.bf16.mxu0 0
        %2322 = vmatpush2.bf16.msra.mxu0 0
        %2323 = vmatprep.subr.bf16.mxu0 0
        %2324 = vmatpush2.bf16.msra.mxu0 0
        %2325 = vmatprep.subr.bf16.mxu0 0
        %2326 = vmatpush2.bf16.msra.mxu0 0
        %2327 = vmatprep.mubr.bf16.mxu0 0
        %2328 = vmatmul.mubr.bf16.gmra.mxu0 %v2293
        %v2329 = vpop.f32.mrf.mxu0
        %v2330 = vadd.f32 0.0, %v2329
        %v2331 = vpop.f32.mrf.mxu0
        %v2332 = vpop.f32.mrf.mxu0
        %v2333 = vpop.f32.mrf.mxu0
        %2334 = vdwg.mxu0
        %v2336 = vsel %vm1061, %v2291, 0
        %2338 = vmatprep.subr.bf16.mxu0 0
        %2339 = vmatpush1.bf16.msra.mxu0 0
        %2340 = vmatprep.subr.bf16.mxu0 0
        %2341 = vmatpush1.bf16.msra.mxu0 0
        %2342 = vmatprep.subr.bf16.mxu0 0
        %2343 = vmatpush1.bf16.msra.mxu0 0
        %2344 = vmatprep.subr.bf16.mxu0 0
        %2345 = vmatpush1.bf16.msra.mxu0 0
        %2346 = vmatprep.subr.bf16.mxu0 0
        %2347 = vmatpush1.bf16.msra.mxu0 0
        %2348 = vmatprep.subr.bf16.mxu0 0
        %2349 = vmatpush1.bf16.msra.mxu0 0
        %2350 = vmatprep.subr.bf16.mxu0 0
        %2351 = vmatpush1.bf16.msra.mxu0 0
        %2352 = vmatprep.subr.bf16.mxu0 0
        %2353 = vmatpush1.bf16.msra.mxu0 %v2287
        %2354 = vmatprep.subr.bf16.mxu0 0
        %2355 = vmatpush2.bf16.msra.mxu0 0
        %2356 = vmatprep.subr.bf16.mxu0 0
        %2357 = vmatpush2.bf16.msra.mxu0 0
        %2358 = vmatprep.subr.bf16.mxu0 0
        %2359 = vmatpush2.bf16.msra.mxu0 0
        %2360 = vmatprep.subr.bf16.mxu0 0
        %2361 = vmatpush2.bf16.msra.mxu0 0
        %2362 = vmatprep.subr.bf16.mxu0 0
        %2363 = vmatpush2.bf16.msra.mxu0 0
        %2364 = vmatprep.subr.bf16.mxu0 0
        %2365 = vmatpush2.bf16.msra.mxu0 0
        %2366 = vmatprep.subr.bf16.mxu0 0
        %2367 = vmatpush2.bf16.msra.mxu0 0
        %2368 = vmatprep.subr.bf16.mxu0 0
        %2369 = vmatpush2.bf16.msra.mxu0 0
        %2370 = vmatprep.mubr.bf16.mxu0 0
        %2371 = vmatmul.mubr.bf16.gmra.mxu0 %v2336
        %v2372 = vpop.f32.mrf.mxu0
        %v2373 = vadd.f32 0.0, %v2372
        %v2374 = vpop.f32.mrf.mxu0
        %v2375 = vpop.f32.mrf.mxu0
        %v2376 = vpop.f32.mrf.mxu0
        %2377 = vdwg.mxu0
        %v2378 = vpack.c.bf16 %v2373, %v2330
        %v2379 = vld [vmem:[#allocation16] sm:$0xf]
        %v2380 = vld [vmem:[#allocation16 + $0x4] sm:$0xf]
        %v2381 = vld [vmem:[#allocation16 + $0x8] sm:$0xf]
        %v2382 = vld [vmem:[#allocation16 + $0xc] sm:$0xf]
        %v2383 = vld [vmem:[#allocation16 + $0x10] sm:$0xf]
        %v2384 = vld [vmem:[#allocation16 + $0x14] sm:$0xf]
        %v2385 = vld [vmem:[#allocation16 + $0x18] sm:$0xf]
        %v2386 = vld [vmem:[#allocation16 + $0x1c] sm:$0xf]
        %v2387 = vld [vmem:[#allocation16 + $0x20] sm:$0xf]
        %v2388 = vld [vmem:[#allocation16 + $0x24] sm:$0xf]
        %v2389 = vld [vmem:[#allocation16 + $0x28] sm:$0xf]
        %v2390 = vld [vmem:[#allocation16 + $0x2c] sm:$0xf]
        %v2391 = vld [vmem:[#allocation16 + $0x30] sm:$0xf]
        %v2392 = vld [vmem:[#allocation16 + $0x34] sm:$0xf]
        %v2393 = vld [vmem:[#allocation16 + $0x38] sm:$0xf]
        %v2394 = vld [vmem:[#allocation16 + $0x3c] sm:$0xf]
        %v2395 = vld [vmem:[%s13] sm:$0x1]
        %v2397 = vlaneseq
        %v2398 = vshrl.u32 %v2397, 7
        %v2399 = vsub.s32 0, %v2398
        %v2400 = vrot.slane %v2395, %v2399
        %v2418 = vunpack.c.l.b16 %v2379
        %v2419 = vunpack.c.l.b16 %v2380
        %v2420 = vunpack.c.l.b16 %v2381
        %v2421 = vunpack.c.l.b16 %v2382
        %v2422 = vunpack.c.l.b16 %v2383
        %v2423 = vunpack.c.l.b16 %v2384
        %v2424 = vunpack.c.l.b16 %v2385
        %v2425 = vunpack.c.l.b16 %v2386
        %v2426 = vunpack.c.l.b16 %v2387
        %v2427 = vunpack.c.l.b16 %v2388
        %v2428 = vunpack.c.l.b16 %v2389
        %v2429 = vunpack.c.l.b16 %v2390
        %v2430 = vunpack.c.l.b16 %v2391
        %v2431 = vunpack.c.l.b16 %v2392
        %v2432 = vunpack.c.l.b16 %v2393
        %v2433 = vunpack.c.l.b16 %v2394
        %v2434 = vpack.c.b16 %v2419, %v2418
        %v2435 = vpack.c.b16 %v2421, %v2420
        %v2436 = vpack.c.b16 %v2423, %v2422
        %v2437 = vpack.c.b16 %v2425, %v2424
        %v2438 = vpack.c.b16 %v2427, %v2426
        %v2439 = vpack.c.b16 %v2429, %v2428
        %v2440 = vpack.c.b16 %v2431, %v2430
        %v2441 = vpack.c.b16 %v2433, %v2432
        %2450 = vmatprep.subr.bf16.mxu0 0
        %2451 = vmatpush1.bf16.msra.mxu0 %v2441
        %2452 = vmatprep.subr.bf16.mxu0 0
        %2453 = vmatpush1.bf16.msra.mxu0 %v2440
        %2454 = vmatprep.subr.bf16.mxu0 0
        %2455 = vmatpush1.bf16.msra.mxu0 %v2439
        %2456 = vmatprep.subr.bf16.mxu0 0
        %2457 = vmatpush1.bf16.msra.mxu0 %v2438
        %2458 = vmatprep.subr.bf16.mxu0 0
        %2459 = vmatpush1.bf16.msra.mxu0 %v2437
        %2460 = vmatprep.subr.bf16.mxu0 0
        %2461 = vmatpush1.bf16.msra.mxu0 %v2436
        %2462 = vmatprep.subr.bf16.mxu0 0
        %2463 = vmatpush1.bf16.msra.mxu0 %v2435
        %2464 = vmatprep.subr.bf16.mxu0 0
        %2465 = vmatpush1.bf16.msra.mxu0 %v2434
        %2466 = vmatprep.subr.bf16.mxu0 0
        %2467 = vmatpush2.bf16.msra.mxu0 0
        %2468 = vmatprep.subr.bf16.mxu0 0
        %2469 = vmatpush2.bf16.msra.mxu0 0
        %2470 = vmatprep.subr.bf16.mxu0 0
        %2471 = vmatpush2.bf16.msra.mxu0 0
        %2472 = vmatprep.subr.bf16.mxu0 0
        %2473 = vmatpush2.bf16.msra.mxu0 0
        %2474 = vmatprep.subr.bf16.mxu0 0
        %2475 = vmatpush2.bf16.msra.mxu0 0
        %2476 = vmatprep.subr.bf16.mxu0 0
        %2477 = vmatpush2.bf16.msra.mxu0 0
        %2478 = vmatprep.subr.bf16.mxu0 0
        %2479 = vmatpush2.bf16.msra.mxu0 0
        %2480 = vmatprep.subr.bf16.mxu0 0
        %2481 = vmatpush2.bf16.msra.mxu0 0
        %2482 = vmatprep.mubr.bf16.mxu0 0
        %2483 = vmatmul.mubr.bf16.gmra.mxu0 %v2378
        %v2484 = vpop.f32.mrf.mxu0
        %v2485 = vadd.f32 %v2400, %v2484
        %v2486 = vpop.f32.mrf.mxu0
        %v2487 = vpop.f32.mrf.mxu0
        %v2488 = vadd.f32 %v2400, %v2487
        %v2489 = vpop.f32.mrf.mxu0
        %2490 = vdwg.mxu0
        %2491 = vst [vmem:[%s648] sm:$0xff] %v2485
        %2492 = vst [vmem:[%s648 + $0x8] sm:$0xff] %v2488
        %s2493 = sand.u32 %s354, 1
        %s2494 = scalar_lea.sflag [#allocation4], %s2493
        %s2495 = sand.u32 %s354, 1
        %s2496 = smul.addr %s2495, 16
        %s2497 = scalar_lea.vmem [#allocation17], %s2496
        // Predicated region
        $region113: #{tpu_custom_call.1} parent=75 // pred_check
          %p2498 = pneg %p364
        $region114: #{tpu_custom_call.1} parent=75 // pred_check_branch
          %2500 = sbr.rel (%p2498) target = $region116
        $region115: #{tpu_custom_call.1} parent=75 // pred_region
          %s2501 = smul.u32 2, %s37
          %s2503 = ssub.s32 256, 256
          %2504 = vsyncadd %s2494, %s2503
          %s2505 = smul.addr %s2501, 128
          %s2506 = scalar_lea.hbm %s14, %s2505
          %s2507 = sshll.u32 %s2497, 4
          %s2508 = int_to_ptr.vmem [resolvable:$true] %s2507
          %2513 = dma.vmem_to_hbm [thread:$0]  %s2508, 256, %s2506, %s2494, 128, 128, 8
        $region116: #{tpu_custom_call.1} parent=75 // pred_fallthru
          _
      $region76: #{tpu_custom_call.1} parent=5 // pred_fallthru
        _
      %p2514 = scmp.le.s32.totalorder 2, %s32
      // Predicated region
      $region117: #{tpu_custom_call.1} parent=5 // pred_check
        %p2515 = pneg %p2514
      $region118: #{tpu_custom_call.1} parent=5 // pred_check_branch
        %2517 = sbr.rel (%p2515) target = $region120
      $region119: #{tpu_custom_call.1} parent=5 // pred_region
        %s2518 = ssub.s32 %s32, 2
        // Predicated region
        $region121: #{tpu_custom_call.1} parent=119 // pred_check
          %p2519 = pneg %p370
        $region122: #{tpu_custom_call.1} parent=119 // pred_check_branch
          %2521 = sbr.rel (%p2519) target = $region124
        $region123: #{tpu_custom_call.1} parent=119 // pred_region
          %s2522 = sand.u32 %s355, 1
          %s2523 = scalar_lea.sflag [#allocation4], %s2522
          %s2524 = sand.u32 %s355, 1
          %s2525 = smul.addr %s2524, 16
          %s2526 = scalar_lea.vmem [#allocation17], %s2525
          %2527 = dma.done %s2523, 256
        $region124: #{tpu_custom_call.1} parent=119 // pred_fallthru
          _
      $region120: #{tpu_custom_call.1} parent=5 // pred_fallthru
        _
    $region6: #{tpu_custom_call.1} parent=1 // loop_footer
      %s36 = sadd.s32 1, %s32
    $region7: #{tpu_custom_call.1} parent=1 // loop_footer_branch
      %31 = sbr.rel target = $region3
    $region8: #{tpu_custom_call.1} parent=1 // loop_exit
      _
    %2528 = vsyncpa [#allocation3], 1
    %s2529 = scalar_lea.sflag [#allocation3], 1
    %2530 = vsyncpa %s2529, 1
    %2531 = vsyncpa [#allocation6], 1
    %s2532 = scalar_lea.sflag [#allocation6], 1
    %2533 = vsyncpa %s2532, 1
    %2534 = vsyncpa [#allocation9], 1
    %2535 = vsyncpa [#allocation12], 1
    %2536 = vsyncpa [#allocation15], 1
    %2537 = vsyncpa [#allocation4], 1
    %s2538 = scalar_lea.sflag [#allocation4], 1
    %2539 = vsyncpa %s2538, 1

</llo_original>
